<compile_context>
chip_gen: v7x
topology: tpu7x:2x2x1
jax: 0.10.0
libtpu: 0.0.40
codegen_flags: <defaults>
</compile_context>

<pallas_src>
import functools

import jax
import jax.numpy as jnp
from jax.experimental import pallas as pl
from jax.experimental.pallas import tpu as pltpu


# ---------------------------------------------------------------------------
# Kernel
# ---------------------------------------------------------------------------

def _write_scalar_block(o_ref, value):
    """Write a scalar into [0, 0] of a lane-dense (8, 128) f32 output block."""
    rr = jax.lax.broadcasted_iota(jnp.int32, (8, 128), 0)
    cc = jax.lax.broadcasted_iota(jnp.int32, (8, 128), 1)
    o_ref[...] = jnp.where((rr == 0) & (cc == 0), value, jnp.float32(0.0))


def _barlow_kernel(z1_ref, z2_ref, m1_ref, is1_ref, m2_ref, is2_ref,
                   o_ref, g_acc, *, batch_size, lambda_coeff, feat_tile):
    i = pl.program_id(0)          # feature tile (rows of C)
    j = pl.program_id(1)          # feature tile (cols of C)
    k = pl.program_id(2)          # batch tile (reduction axis, innermost)
    nk = pl.num_programs(2)

    # ---- hot loop: pure DMA + MXU ---------------------------------------
    # Contract over the batch axis; bf16 inputs feed the MXU directly,
    # accumulation is f32.  (dot_general with LHS-dim-0 contraction is the
    # standard MXU transposed-LHS path; no explicit transpose is emitted.)
    g = jax.lax.dot_general(
        z1_ref[...], z2_ref[...],
        dimension_numbers=(((0,), (0,)), ((), ())),
        preferred_element_type=jnp.float32,
    )

    @pl.when(k == 0)
    def _first_step():
        g_acc[...] = g            # direct write: no zero-init + RMW

    @pl.when(k != 0)
    def _accumulate():
        g_acc[...] += g

    # ---- finalize (once per (i, j) tile, on the last batch step) ---------
    lam = jnp.float32(lambda_coeff)
    inv_b = jnp.float32(1.0 / batch_size)

    def outer(u, v):
        # Rank-1 outer product via the MXU (contract the size-1 leading axis);
        # avoids any in-kernel transpose/relayout of the (1, T) stat rows.
        return jax.lax.dot_general(
            u, v,
            dimension_numbers=(((0,), (0,)), ((), ())),
            preferred_element_type=jnp.float32,
        )

    def cross_corr_tile():
        # C = (G/B - m1 (x) m2) * (inv_std1 (x) inv_std2)
        return ((g_acc[...] * inv_b - outer(m1_ref[...], m2_ref[...]))
                * outer(is1_ref[...], is2_ref[...]))

    is_last = k == nk - 1

    @pl.when(is_last & (i != j))
    def _finalize_offdiag():
        # Tile contains no diagonal elements: just lambda * sum(C^2).
        c = cross_corr_tile()
        _write_scalar_block(o_ref, lam * jnp.sum(c * c))

    @pl.when(is_last & (i == j))
    def _finalize_diag():
        c = cross_corr_tile()
        csq = c * c
        t = feat_tile
        rr = jax.lax.broadcasted_iota(jnp.int32, (t, t), 0)
        cc = jax.lax.broadcasted_iota(jnp.int32, (t, t), 1)
        diff = c - jnp.float32(1.0)
        # diag contributes (c-1)^2, off-diag lambda*c^2:
        #   lambda*sum(c^2) + sum_diag((c-1)^2 - lambda*c^2)
        diag_extra = jnp.where(rr == cc, diff * diff - lam * csq,
                               jnp.float32(0.0))
        _write_scalar_block(o_ref, lam * jnp.sum(csq) + jnp.sum(diag_extra))


# ---------------------------------------------------------------------------
# Tiling / VMEM budgeting (generation-aware)
# ---------------------------------------------------------------------------

_FINALIZE_TEMP_TILES = 5       # rough budget for (T, T) f32 temps in finalize
_MIN_BATCH_TILE = 8
_MAX_BATCH_TILE = 2048


def _vmem_budget_bytes():
    cap = 128 * 1024 * 1024    # v5e/v6e default if the query is unavailable
    try:
        info = pltpu.get_tpu_info()
        c = getattr(info, "vmem_capacity_bytes", None)
        if c:
            cap = int(c)
    except Exception:
        pass
    # Leave 25% headroom for Mosaic internal scratch / stack / semaphores.
    return (cap * 3) // 4


def _fixed_tile_bytes(feat_tile):
    acc = feat_tile * feat_tile * 4                          # f32 G accumulator
    temps = _FINALIZE_TEMP_TILES * feat_tile * feat_tile * 4  # finalize temps
    stats = 4 * 2 * feat_tile * 4                            # (1, T) stat blocks
    out = 2 * 8 * 128 * 4                                    # output block bufs
    return acc + temps + stats + out


def _pick_feat_tile(d, itemsize, budget):
    for t in (1024, 512, 256, 128):
        if d % t != 0:
            continue
        min_inputs = 4 * _MIN_BATCH_TILE * t * itemsize  # 2 inputs x 2 buffers
        if _fixed_tile_bytes(t) + min_inputs <= budget:
            return t
    return d   # small or non-128-divisible feature dim: one full-extent tile


def _pick_batch_tile(b, feat_tile, itemsize, budget):
    avail = max(budget - _fixed_tile_bytes(feat_tile),
                4 * _MIN_BATCH_TILE * feat_tile * itemsize)
    cap = avail // (4 * feat_tile * itemsize)   # 2 inputs x 2 pipeline buffers
    cap = max(_MIN_BATCH_TILE, (cap // 8) * 8)
    full = ((b + 7) // 8) * 8                   # batch rounded to sublane mult
    tile = min(cap, full, _MAX_BATCH_TILE)
    return max(_MIN_BATCH_TILE, (tile // 8) * 8)


# ---------------------------------------------------------------------------
# Wrapper
# ---------------------------------------------------------------------------

def barlow_twin_loss(z1, z2, *, lambda_coeff=0.005):
    """Pallas implementation of BarlowTwinLoss.forward(z1, z2)."""
    assert z1.shape == z2.shape and z1.ndim == 2
    batch_size, proj_dim = z1.shape
    # NOTE: batch_size == 1 yields NaN via the unbiased std, matching
    # torch.std(dim=0) semantics.

    # ---- two-pass per-feature stats pre-pass (pure JAX, O(B*D)) ----------
    z1f = z1.astype(jnp.float32)
    z2f = z2.astype(jnp.float32)
    m1 = jnp.mean(z1f, axis=0, keepdims=True)                     # (1, D) f32
    m2 = jnp.mean(z2f, axis=0, keepdims=True)
    std1 = jnp.std(z1f, axis=0, ddof=1, keepdims=True)            # unbiased
    std2 = jnp.std(z2f, axis=0, ddof=1, keepdims=True)
    inv_std1 = 1.0 / std1
    inv_std2 = 1.0 / std2

    # ---- tiling -----------------------------------------------------------
    itemsize = jnp.dtype(z1.dtype).itemsize
    budget = _vmem_budget_bytes()
    feat_tile = _pick_feat_tile(proj_dim, itemsize, budget)
    batch_tile = _pick_batch_tile(batch_size, feat_tile, itemsize, budget)

    n_i = max(proj_dim // feat_tile, 1)
    n_j = n_i
    n_k = pl.cdiv(batch_size, batch_tile)

    # Zero-pad ragged batches up to a multiple of the batch tile.  Zero rows
    # add nothing to G = z1^T @ z2 and the stats above use the true batch, so
    # the padding is exact.
    padded_b = n_k * batch_tile
    if padded_b != batch_size:
        pad = padded_b - batch_size
        z1 = jnp.pad(z1, ((0, pad), (0, 0)))
        z2 = jnp.pad(z2, ((0, pad), (0, 0)))

    kernel = functools.partial(
        _barlow_kernel,
        batch_size=batch_size,
        lambda_coeff=lambda_coeff,
        feat_tile=feat_tile,
    )

    out = pl.pallas_call(
        kernel,
        out_shape=jax.ShapeDtypeStruct((n_i * 8, n_j * 128), jnp.float32),
        grid_spec=pltpu.PrefetchScalarGridSpec(
            num_scalar_prefetch=0,
            grid=(n_i, n_j, n_k),
            in_specs=[
                pl.BlockSpec((batch_tile, feat_tile), lambda i, j, k: (k, i)),
                pl.BlockSpec((batch_tile, feat_tile), lambda i, j, k: (k, j)),
                pl.BlockSpec((1, feat_tile), lambda i, j, k: (0, i)),  # mean1
                pl.BlockSpec((1, feat_tile), lambda i, j, k: (0, i)),  # 1/std1
                pl.BlockSpec((1, feat_tile), lambda i, j, k: (0, j)),  # mean2
                pl.BlockSpec((1, feat_tile), lambda i, j, k: (0, j)),  # 1/std2
            ],
            out_specs=pl.BlockSpec((8, 128), lambda i, j, k: (i, j)),
            scratch_shapes=[
                pltpu.VMEM((feat_tile, feat_tile), jnp.float32),   # G accumulator
            ],
        ),
        compiler_params=pltpu.CompilerParams(
            dimension_semantics=("parallel", "parallel", "arbitrary"),
            vmem_limit_bytes=int(budget),
        ),
    )(z1, z2, m1, inv_std1, m2, inv_std2)

    # Tiny reduce over the per-(i, j)-tile partial losses.
    return jnp.sum(out)


# ---------------------------------------------------------------------------
# Reference + self-test
# ---------------------------------------------------------------------------

def _barlow_ref(z1, z2, lambda_coeff=0.005):
    """Pure-JAX reference mirroring the PyTorch module exactly."""
    b = z1.shape[0]
    std1 = jnp.std(z1, axis=0, ddof=1)
    std2 = jnp.std(z2, axis=0, ddof=1)
    z1n = (z1 - jnp.mean(z1, axis=0)) / std1
    z2n = (z2 - jnp.mean(z2, axis=0)) / std2
    c = (z1n.T @ z2n) / b
    on_diag = jnp.sum((jnp.diagonal(c) - 1.0) ** 2)
    off_diag = jnp.sum(c ** 2) - jnp.sum(jnp.diagonal(c) ** 2)
    return on_diag + lambda_coeff * off_diag


if __name__ == "__main__":
    batch_size = 8
    projection_dim = 128
    lambda_coeff = 0.005

    key = jax.random.PRNGKey(0)
    k1, k2 = jax.random.split(key)
    z1 = jax.random.normal(k1, (batch_size, projection_dim), dtype=jnp.float32)
    z2 = jax.random.normal(k2, (batch_size, projection_dim), dtype=jnp.float32)

    loss = barlow_twin_loss(z1, z2, lambda_coeff=lambda_coeff)
    loss = jax.block_until_ready(loss)

    ref = _barlow_ref(z1, z2, lambda_coeff)
    assert jnp.allclose(loss, ref, rtol=1e-3, atol=1e-4), (loss, ref)

    print("KERNEL_OK")
</pallas_src>

<mosaic_0001>
module attributes {stable_mosaic.version = 11 : i64} {
  func.func @_barlow_kernel(%arg0: i32, %arg1: i32, %arg2: i32, %arg3: memref<8x128xf32, #tpu.memory_space<vmem>>, %arg4: memref<8x128xf32, #tpu.memory_space<vmem>>, %arg5: memref<1x128xf32, #tpu.memory_space<vmem>>, %arg6: memref<1x128xf32, #tpu.memory_space<vmem>>, %arg7: memref<1x128xf32, #tpu.memory_space<vmem>>, %arg8: memref<1x128xf32, #tpu.memory_space<vmem>>, %arg9: memref<8x128xf32, #tpu.memory_space<vmem>>, %arg10: memref<128x128xf32, #tpu.memory_space<vmem>>) attributes {dimension_semantics = [#tpu.dimension_semantics<parallel>, #tpu.dimension_semantics<parallel>, #tpu.dimension_semantics<arbitrary>], iteration_bounds = array<i64: 1, 1, 1>, scalar_prefetch = 0 : i64, scratch_operands = 1 : i64, tpu.core_type = #tpu.core_type<tc>, window_params = [{transform_indices = @transform_0, window_bounds = array<i64: 8, 128>}, {transform_indices = @transform_1, window_bounds = array<i64: 8, 128>}, {transform_indices = @transform_2, window_bounds = array<i64: 1, 128>}, {transform_indices = @transform_3, window_bounds = array<i64: 1, 128>}, {transform_indices = @transform_4, window_bounds = array<i64: 1, 128>}, {transform_indices = @transform_5, window_bounds = array<i64: 1, 128>}, {transform_indices = @transform_6, window_bounds = array<i64: 8, 128>}]} {
    %c0 = arith.constant 0 : index
    %c0_0 = arith.constant 0 : index
    %0 = vector.load %arg3[%c0, %c0_0] : memref<8x128xf32, #tpu.memory_space<vmem>>, vector<8x128xf32>
    %c0_1 = arith.constant 0 : index
    %c0_2 = arith.constant 0 : index
    %1 = vector.load %arg4[%c0_1, %c0_2] : memref<8x128xf32, #tpu.memory_space<vmem>>, vector<8x128xf32>
    %cst = arith.constant dense<0.000000e+00> : vector<128x128xf32>
    %2 = tpu.matmul %0, %1, %cst {dimension_numbers = #tpu.dot_dimension_numbers<[0], [0], [1], [1], [0, 1, 1, 1], [], []>} : vector<8x128xf32>, vector<8x128xf32>, vector<128x128xf32> -> vector<128x128xf32>
    %c0_i32 = arith.constant 0 : i32
    %3 = arith.cmpi eq, %arg2, %c0_i32 : i32
    %4 = arith.extui %3 : i1 to i32
    %c0_i32_3 = arith.constant 0 : i32
    %5 = arith.cmpi ne, %4, %c0_i32_3 : i32
    scf.if %5 {
      %c0_13 = arith.constant 0 : index
      %c0_14 = arith.constant 0 : index
      %18 = vector.load %arg10[%c0_13, %c0_14] : memref<128x128xf32, #tpu.memory_space<vmem>>, vector<128x128xf32>
      tpu.vector_store %arg10[%c0_13, %c0_14], %2 {strides = array<i32>} : memref<128x128xf32, #tpu.memory_space<vmem>>, vector<128x128xf32>,
    } else {
    }
    %c0_i32_4 = arith.constant 0 : i32
    %6 = arith.cmpi ne, %arg2, %c0_i32_4 : i32
    %7 = arith.extui %6 : i1 to i32
    %c0_i32_5 = arith.constant 0 : i32
    %8 = arith.cmpi ne, %7, %c0_i32_5 : i32
    scf.if %8 {
      %c0_13 = arith.constant 0 : index
      %c0_14 = arith.constant 0 : index
      %18 = vector.load %arg10[%c0_13, %c0_14] : memref<128x128xf32, #tpu.memory_space<vmem>>, vector<128x128xf32>
      %19 = arith.addf %18, %2 : vector<128x128xf32>
      %c0_15 = arith.constant 0 : index
      %c0_16 = arith.constant 0 : index
      %20 = vector.load %arg10[%c0_15, %c0_16] : memref<128x128xf32, #tpu.memory_space<vmem>>, vector<128x128xf32>
      tpu.vector_store %arg10[%c0_15, %c0_16], %19 {strides = array<i32>} : memref<128x128xf32, #tpu.memory_space<vmem>>, vector<128x128xf32>,
    } else {
    }
    %c0_i32_6 = arith.constant 0 : i32
    %9 = arith.cmpi eq, %arg2, %c0_i32_6 : i32
    %10 = arith.cmpi ne, %arg0, %arg1 : i32
    %11 = arith.andi %9, %10 : i1
    %12 = arith.extui %11 : i1 to i32
    %cst_7 = arith.constant 1.250000e-01 : f32
    %cst_8 = arith.constant 5.000000e-03 : f32
    %c0_i32_9 = arith.constant 0 : i32
    %13 = arith.cmpi ne, %12, %c0_i32_9 : i32
    scf.if %13 {
      %c0_13 = arith.constant 0 : index
      %c0_14 = arith.constant 0 : index
      %18 = vector.load %arg10[%c0_13, %c0_14] : memref<128x128xf32, #tpu.memory_space<vmem>>, vector<128x128xf32>
      %19 = vector.broadcast %cst_7 : f32 to vector<128x128xf32>
      %20 = arith.mulf %18, %19 : vector<128x128xf32>
      %c0_15 = arith.constant 0 : index
      %c0_16 = arith.constant 0 : index
      %21 = vector.load %arg5[%c0_15, %c0_16] : memref<1x128xf32, #tpu.memory_space<vmem>>, vector<1x128xf32>
      %c0_17 = arith.constant 0 : index
      %c0_18 = arith.constant 0 : index
      %22 = vector.load %arg7[%c0_17, %c0_18] : memref<1x128xf32, #tpu.memory_space<vmem>>, vector<1x128xf32>
      %cst_19 = arith.constant dense<0.000000e+00> : vector<128x128xf32>
      %23 = tpu.matmul %21, %22, %cst_19 {dimension_numbers = #tpu.dot_dimension_numbers<[0], [0], [1], [1], [0, 1, 1, 1], [], []>} : vector<1x128xf32>, vector<1x128xf32>, vector<128x128xf32> -> vector<128x128xf32>
      %24 = arith.subf %20, %23 : vector<128x128xf32>
      %c0_20 = arith.constant 0 : index
      %c0_21 = arith.constant 0 : index
      %25 = vector.load %arg6[%c0_20, %c0_21] : memref<1x128xf32, #tpu.memory_space<vmem>>, vector<1x128xf32>
      %c0_22 = arith.constant 0 : index
      %c0_23 = arith.constant 0 : index
      %26 = vector.load %arg8[%c0_22, %c0_23] : memref<1x128xf32, #tpu.memory_space<vmem>>, vector<1x128xf32>
      %cst_24 = arith.constant dense<0.000000e+00> : vector<128x128xf32>
      %27 = tpu.matmul %25, %26, %cst_24 {dimension_numbers = #tpu.dot_dimension_numbers<[0], [0], [1], [1], [0, 1, 1, 1], [], []>} : vector<1x128xf32>, vector<1x128xf32>, vector<128x128xf32> -> vector<128x128xf32>
      %28 = arith.mulf %24, %27 : vector<128x128xf32>
      %29 = arith.mulf %28, %28 : vector<128x128xf32>
      %30 = vector.shape_cast %29 : vector<128x128xf32> to vector<1x128x128xf32>
      %cst_25 = arith.constant dense<0.000000e+00> : vector<1xf32>
      %31 = vector.multi_reduction <add>, %30, %cst_25 [1, 2] : vector<1x128x128xf32> to vector<1xf32>
      %32 = vector.shape_cast %31 : vector<1xf32> to vector<1x1x1xf32>
      %33 = vector.extract %32[0, 0, 0] : f32 from vector<1x1x1xf32>
      %34 = arith.mulf %cst_8, %33 : f32
      %35 = tpu.iota {dimensions = array<i32: 0>} : vector<8x128xi32>
      %36 = tpu.iota {dimensions = array<i32: 1>} : vector<8x128xi32>
      %c0_i32_26 = arith.constant 0 : i32
      %37 = vector.broadcast %c0_i32_26 : i32 to vector<8x128xi32>
      %38 = arith.cmpi eq, %35, %37 : vector<8x128xi32>
      %c0_i32_27 = arith.constant 0 : i32
      %39 = vector.broadcast %c0_i32_27 : i32 to vector<8x128xi32>
      %40 = arith.cmpi eq, %36, %39 : vector<8x128xi32>
      %41 = arith.andi %38, %40 : vector<8x128xi1>
      %cst_28 = arith.constant 0.000000e+00 : f32
      %42 = vector.broadcast %34 : f32 to vector<8x128xf32>
      %43 = vector.broadcast %cst_28 : f32 to vector<8x128xf32>
      %44 = arith.select %41, %42, %43 : vector<8x128xi1>, vector<8x128xf32>
      %c0_29 = arith.constant 0 : index
      %c0_30 = arith.constant 0 : index
      %45 = vector.load %arg9[%c0_29, %c0_30] : memref<8x128xf32, #tpu.memory_space<vmem>>, vector<8x128xf32>
      tpu.vector_store %arg9[%c0_29, %c0_30], %44 {strides = array<i32>} : memref<8x128xf32, #tpu.memory_space<vmem>>, vector<8x128xf32>,
    } else {
    }
    %14 = arith.cmpi eq, %arg0, %arg1 : i32
    %15 = arith.andi %9, %14 : i1
    %16 = arith.extui %15 : i1 to i32
    %cst_10 = arith.constant 1.250000e-01 : f32
    %cst_11 = arith.constant 5.000000e-03 : f32
    %c0_i32_12 = arith.constant 0 : i32
    %17 = arith.cmpi ne, %16, %c0_i32_12 : i32
    scf.if %17 {
      %c0_13 = arith.constant 0 : index
      %c0_14 = arith.constant 0 : index
      %18 = vector.load %arg10[%c0_13, %c0_14] : memref<128x128xf32, #tpu.memory_space<vmem>>, vector<128x128xf32>
      %19 = vector.broadcast %cst_10 : f32 to vector<128x128xf32>
      %20 = arith.mulf %18, %19 : vector<128x128xf32>
      %c0_15 = arith.constant 0 : index
      %c0_16 = arith.constant 0 : index
      %21 = vector.load %arg5[%c0_15, %c0_16] : memref<1x128xf32, #tpu.memory_space<vmem>>, vector<1x128xf32>
      %c0_17 = arith.constant 0 : index
      %c0_18 = arith.constant 0 : index
      %22 = vector.load %arg7[%c0_17, %c0_18] : memref<1x128xf32, #tpu.memory_space<vmem>>, vector<1x128xf32>
      %cst_19 = arith.constant dense<0.000000e+00> : vector<128x128xf32>
      %23 = tpu.matmul %21, %22, %cst_19 {dimension_numbers = #tpu.dot_dimension_numbers<[0], [0], [1], [1], [0, 1, 1, 1], [], []>} : vector<1x128xf32>, vector<1x128xf32>, vector<128x128xf32> -> vector<128x128xf32>
      %24 = arith.subf %20, %23 : vector<128x128xf32>
      %c0_20 = arith.constant 0 : index
      %c0_21 = arith.constant 0 : index
      %25 = vector.load %arg6[%c0_20, %c0_21] : memref<1x128xf32, #tpu.memory_space<vmem>>, vector<1x128xf32>
      %c0_22 = arith.constant 0 : index
      %c0_23 = arith.constant 0 : index
      %26 = vector.load %arg8[%c0_22, %c0_23] : memref<1x128xf32, #tpu.memory_space<vmem>>, vector<1x128xf32>
      %cst_24 = arith.constant dense<0.000000e+00> : vector<128x128xf32>
      %27 = tpu.matmul %25, %26, %cst_24 {dimension_numbers = #tpu.dot_dimension_numbers<[0], [0], [1], [1], [0, 1, 1, 1], [], []>} : vector<1x128xf32>, vector<1x128xf32>, vector<128x128xf32> -> vector<128x128xf32>
      %28 = arith.mulf %24, %27 : vector<128x128xf32>
      %29 = arith.mulf %28, %28 : vector<128x128xf32>
      %30 = tpu.iota {dimensions = array<i32: 0>} : vector<128x128xi32>
      %31 = tpu.iota {dimensions = array<i32: 1>} : vector<128x128xi32>
      %cst_25 = arith.constant 1.000000e+00 : f32
      %32 = vector.broadcast %cst_25 : f32 to vector<128x128xf32>
      %33 = arith.subf %28, %32 : vector<128x128xf32>
      %34 = arith.cmpi eq, %30, %31 : vector<128x128xi32>
      %35 = arith.mulf %33, %33 : vector<128x128xf32>
      %36 = vector.broadcast %cst_11 : f32 to vector<128x128xf32>
      %37 = arith.mulf %36, %29 : vector<128x128xf32>
      %38 = arith.subf %35, %37 : vector<128x128xf32>
      %cst_26 = arith.constant 0.000000e+00 : f32
      %39 = vector.broadcast %cst_26 : f32 to vector<128x128xf32>
      %40 = arith.select %34, %38, %39 : vector<128x128xi1>, vector<128x128xf32>
      %41 = vector.shape_cast %29 : vector<128x128xf32> to vector<1x128x128xf32>
      %cst_27 = arith.constant dense<0.000000e+00> : vector<1xf32>
      %42 = vector.multi_reduction <add>, %41, %cst_27 [1, 2] : vector<1x128x128xf32> to vector<1xf32>
      %43 = vector.shape_cast %42 : vector<1xf32> to vector<1x1x1xf32>
      %44 = vector.extract %43[0, 0, 0] : f32 from vector<1x1x1xf32>
      %45 = arith.mulf %cst_11, %44 : f32
      %46 = vector.shape_cast %40 : vector<128x128xf32> to vector<1x128x128xf32>
      %cst_28 = arith.constant dense<0.000000e+00> : vector<1xf32>
      %47 = vector.multi_reduction <add>, %46, %cst_28 [1, 2] : vector<1x128x128xf32> to vector<1xf32>
      %48 = vector.shape_cast %47 : vector<1xf32> to vector<1x1x1xf32>
      %49 = vector.extract %48[0, 0, 0] : f32 from vector<1x1x1xf32>
      %50 = arith.addf %45, %49 : f32
      %51 = tpu.iota {dimensions = array<i32: 0>} : vector<8x128xi32>
      %52 = tpu.iota {dimensions = array<i32: 1>} : vector<8x128xi32>
      %c0_i32_29 = arith.constant 0 : i32
      %53 = vector.broadcast %c0_i32_29 : i32 to vector<8x128xi32>
      %54 = arith.cmpi eq, %51, %53 : vector<8x128xi32>
      %c0_i32_30 = arith.constant 0 : i32
      %55 = vector.broadcast %c0_i32_30 : i32 to vector<8x128xi32>
      %56 = arith.cmpi eq, %52, %55 : vector<8x128xi32>
      %57 = arith.andi %54, %56 : vector<8x128xi1>
      %cst_31 = arith.constant 0.000000e+00 : f32
      %58 = vector.broadcast %50 : f32 to vector<8x128xf32>
      %59 = vector.broadcast %cst_31 : f32 to vector<8x128xf32>
      %60 = arith.select %57, %58, %59 : vector<8x128xi1>, vector<8x128xf32>
      %c0_32 = arith.constant 0 : index
      %c0_33 = arith.constant 0 : index
      %61 = vector.load %arg9[%c0_32, %c0_33] : memref<8x128xf32, #tpu.memory_space<vmem>>, vector<8x128xf32>
      tpu.vector_store %arg9[%c0_32, %c0_33], %60 {strides = array<i32>} : memref<8x128xf32, #tpu.memory_space<vmem>>, vector<8x128xf32>,
    } else {
    }
    return
  }
  func.func @transform_0(%arg0: i32, %arg1: i32, %arg2: i32) -> (i32, i32) {
    %c0_i32 = arith.constant 0 : i32
    return %arg2, %arg0 : i32, i32
  }
  func.func @transform_1(%arg0: i32, %arg1: i32, %arg2: i32) -> (i32, i32) {
    %c0_i32 = arith.constant 0 : i32
    return %arg2, %arg1 : i32, i32
  }
  func.func @transform_2(%arg0: i32, %arg1: i32, %arg2: i32) -> (i32, i32) {
    %c0_i32 = arith.constant 0 : i32
    %c0_i32_0 = arith.constant 0 : i32
    return %c0_i32, %arg0 : i32, i32
  }
  func.func @transform_3(%arg0: i32, %arg1: i32, %arg2: i32) -> (i32, i32) {
    %c0_i32 = arith.constant 0 : i32
    %c0_i32_0 = arith.constant 0 : i32
    return %c0_i32, %arg0 : i32, i32
  }
  func.func @transform_4(%arg0: i32, %arg1: i32, %arg2: i32) -> (i32, i32) {
    %c0_i32 = arith.constant 0 : i32
    %c0_i32_0 = arith.constant 0 : i32
    return %c0_i32, %arg1 : i32, i32
  }
  func.func @transform_5(%arg0: i32, %arg1: i32, %arg2: i32) -> (i32, i32) {
    %c0_i32 = arith.constant 0 : i32
    %c0_i32_0 = arith.constant 0 : i32
    return %c0_i32, %arg1 : i32, i32
  }
  func.func @transform_6(%arg0: i32, %arg1: i32, %arg2: i32) -> (i32, i32) {
    %c0_i32 = arith.constant 0 : i32
    return %arg0, %arg1 : i32, i32
  }
}

</mosaic_0001>

<llo_original>
// kernel: tpu_custom_call.1
$region0: #{tpu_custom_call.1}
  #allocation0 [shape = 'u32[]', space=smem, size = 0x4, offset = 0x4, fixed_abs, tag = 'smem constant byte address 0x4 - core index']
  #allocation1 [shape = 'u32[144,128]{1,0:T(1,128)}', space=vmem, size = 0x12000, scoped, tag = 'internal scratch']
  #allocation2 [shape = 'f32[128,128]{1,0:T(8,128)}', space=vmem, size = 0x10000, scoped, tag = 'scratch operand']
  %s0 = inlined_call_operand.hbm [shape: f32[8,128], index: 0, kind: input, shape index: {}]
  %s1 = inlined_call_operand.hbm [shape: f32[8,128], index: 1, kind: input, shape index: {}]
  %s2 = inlined_call_operand.hbm [shape: f32[1,128], index: 2, kind: input, shape index: {}]
  %s3 = inlined_call_operand.hbm [shape: f32[1,128], index: 3, kind: input, shape index: {}]
  %s4 = inlined_call_operand.hbm [shape: f32[1,128], index: 4, kind: input, shape index: {}]
  %s5 = inlined_call_operand.hbm [shape: f32[1,128], index: 5, kind: input, shape index: {}]
  %s6 = inlined_call_operand.hbm [shape: f32[8,128], index: 6, kind: output, shape index: {}]
  %s7 = sld [smem:[#allocation0]]
  $region74: #{tpu_custom_call.1} parent=0
    _
  %s9 = ssub.s32 1, %s7
  %s10 = scalar_select 0, %s9, %s7
  $region1: #{tpu_custom_call.1} parent=0
    #allocation3 [shape = 'u8[4096]{0}', space=vmem, size = 0x1000, scoped, tag = 'input window, operand 0, single buffered']
    #allocation4 [shape = 's32[1]{0}', space=sflag, size = 0x4, scoped, tag = 'scoped memory for tpu_custom_call.1']
    #allocation5 [shape = 's32[1]{0}', space=sflag, size = 0x4, scoped, tag = 'scoped memory for tpu_custom_call.1']
    #allocation6 [shape = 'u8[4096]{0}', space=vmem, size = 0x1000, scoped, tag = 'input window, operand 1, single buffered']
    #allocation7 [shape = 's32[1]{0}', space=sflag, size = 0x4, scoped, tag = 'scoped memory for tpu_custom_call.1']
    #allocation8 [shape = 'u8[512]{0}', space=vmem, size = 0x400, scoped, tag = 'input window, operand 2, single buffered']
    #allocation9 [shape = 'u8[512]{0}', space=vmem, size = 0x400, scoped, tag = 'input window, operand 3, single buffered']
    #allocation10 [shape = 's32[1]{0}', space=sflag, size = 0x4, scoped, tag = 'scoped memory for tpu_custom_call.1']
    #allocation11 [shape = 'u8[512]{0}', space=vmem, size = 0x400, scoped, tag = 'input window, operand 4, single buffered']
    #allocation12 [shape = 'u8[512]{0}', space=vmem, size = 0x400, scoped, tag = 'input window, operand 5, single buffered']
    #allocation13 [shape = 's32[1]{0}', space=sflag, size = 0x4, scoped, tag = 'scoped memory for tpu_custom_call.1']
    #allocation14 [shape = 'u8[4096]{0}', space=vmem, size = 0x1000, scoped, tag = 'output window, operand 0, single buffered']
    %11 = vsyncpa [#allocation4], 0
    %12 = vsyncpa [#allocation7], 0
    %13 = vsyncpa [#allocation10], 0
    %14 = vsyncpa [#allocation13], 0
    %15 = vsyncpa [#allocation5], 0
    // Predicated region
    $region2: #{tpu_custom_call.1} parent=1 // pred_check
      _
    $region3: #{tpu_custom_call.1} parent=1 // pred_check_branch
      %17 = sbr.rel (0) target = $region5
    $region4: #{tpu_custom_call.1} parent=1 // pred_region
      %s19 = ssub.s32 128, 128
      %20 = vsyncadd [#allocation4], %s19
      %s22 = sshll.u32 [#allocation3], 4
      %s23 = int_to_ptr.vmem [resolvable:$true] %s22
      %25 = dma.hbm_to_vmem [thread:$0]  %s0, 128, %s23, [#allocation4]
    $region5: #{tpu_custom_call.1} parent=1 // pred_fallthru
      _
    // Predicated region
    $region6: #{tpu_custom_call.1} parent=1 // pred_check
      _
    $region7: #{tpu_custom_call.1} parent=1 // pred_check_branch
      %27 = sbr.rel (0) target = $region9
    $region8: #{tpu_custom_call.1} parent=1 // pred_region
      %s29 = ssub.s32 128, 128
      %30 = vsyncadd [#allocation7], %s29
      %s32 = sshll.u32 [#allocation6], 4
      %s33 = int_to_ptr.vmem [resolvable:$true] %s32
      %35 = dma.hbm_to_vmem [thread:$0]  %s1, 128, %s33, [#allocation7]
    $region9: #{tpu_custom_call.1} parent=1 // pred_fallthru
      _
    // Predicated region
    $region10: #{tpu_custom_call.1} parent=1 // pred_check
      _
    $region11: #{tpu_custom_call.1} parent=1 // pred_check_branch
      %37 = sbr.rel (0) target = $region13
    $region12: #{tpu_custom_call.1} parent=1 // pred_region
      %s39 = ssub.s32 16, 16
      %40 = vsyncadd [#allocation7], %s39
      %s42 = sshll.u32 [#allocation8], 4
      %s43 = int_to_ptr.vmem [resolvable:$true] %s42
      %45 = dma.hbm_to_vmem [thread:$0]  %s2, 16, %s43, [#allocation7]
    $region13: #{tpu_custom_call.1} parent=1 // pred_fallthru
      _
    // Predicated region
    $region14: #{tpu_custom_call.1} parent=1 // pred_check
      _
    $region15: #{tpu_custom_call.1} parent=1 // pred_check_branch
      %47 = sbr.rel (0) target = $region17
    $region16: #{tpu_custom_call.1} parent=1 // pred_region
      %s49 = ssub.s32 16, 16
      %50 = vsyncadd [#allocation10], %s49
      %s52 = sshll.u32 [#allocation9], 4
      %s53 = int_to_ptr.vmem [resolvable:$true] %s52
      %55 = dma.hbm_to_vmem [thread:$0]  %s3, 16, %s53, [#allocation10]
    $region17: #{tpu_custom_call.1} parent=1 // pred_fallthru
      _
    // Predicated region
    $region18: #{tpu_custom_call.1} parent=1 // pred_check
      _
    $region19: #{tpu_custom_call.1} parent=1 // pred_check_branch
      %57 = sbr.rel (0) target = $region21
    $region20: #{tpu_custom_call.1} parent=1 // pred_region
      %s59 = ssub.s32 16, 16
      %60 = vsyncadd [#allocation10], %s59
      %s62 = sshll.u32 [#allocation11], 4
      %s63 = int_to_ptr.vmem [resolvable:$true] %s62
      %65 = dma.hbm_to_vmem [thread:$0]  %s4, 16, %s63, [#allocation10]
    $region21: #{tpu_custom_call.1} parent=1 // pred_fallthru
      _
    // Predicated region
    $region22: #{tpu_custom_call.1} parent=1 // pred_check
      _
    $region23: #{tpu_custom_call.1} parent=1 // pred_check_branch
      %67 = sbr.rel (0) target = $region25
    $region24: #{tpu_custom_call.1} parent=1 // pred_region
      %s69 = ssub.s32 16, 16
      %70 = vsyncadd [#allocation13], %s69
      %s72 = sshll.u32 [#allocation12], 4
      %s73 = int_to_ptr.vmem [resolvable:$true] %s72
      %75 = dma.hbm_to_vmem [thread:$0]  %s5, 16, %s73, [#allocation13]
    $region25: #{tpu_custom_call.1} parent=1 // pred_fallthru
      _
    // Predicated region
    $region26: #{tpu_custom_call.1} parent=1 // pred_check
      _
    $region27: #{tpu_custom_call.1} parent=1 // pred_check_branch
      %77 = sbr.rel (0) target = $region29
    $region28: #{tpu_custom_call.1} parent=1 // pred_region
      %78 = dma.done [#allocation4], 128
    $region29: #{tpu_custom_call.1} parent=1 // pred_fallthru
      _
    // Predicated region
    $region30: #{tpu_custom_call.1} parent=1 // pred_check
      _
    $region31: #{tpu_custom_call.1} parent=1 // pred_check_branch
      %80 = sbr.rel (0) target = $region33
    $region32: #{tpu_custom_call.1} parent=1 // pred_region
      %81 = dma.done [#allocation7], 128
    $region33: #{tpu_custom_call.1} parent=1 // pred_fallthru
      _
    // Predicated region
    $region34: #{tpu_custom_call.1} parent=1 // pred_check
      _
    $region35: #{tpu_custom_call.1} parent=1 // pred_check_branch
      %83 = sbr.rel (0) target = $region37
    $region36: #{tpu_custom_call.1} parent=1 // pred_region
      %84 = dma.done [#allocation7], 16
    $region37: #{tpu_custom_call.1} parent=1 // pred_fallthru
      _
    // Predicated region
    $region38: #{tpu_custom_call.1} parent=1 // pred_check
      _
    $region39: #{tpu_custom_call.1} parent=1 // pred_check_branch
      %86 = sbr.rel (0) target = $region41
    $region40: #{tpu_custom_call.1} parent=1 // pred_region
      %87 = dma.done [#allocation10], 16
    $region41: #{tpu_custom_call.1} parent=1 // pred_fallthru
      _
    // Predicated region
    $region42: #{tpu_custom_call.1} parent=1 // pred_check
      _
    $region43: #{tpu_custom_call.1} parent=1 // pred_check_branch
      %89 = sbr.rel (0) target = $region45
    $region44: #{tpu_custom_call.1} parent=1 // pred_region
      %90 = dma.done [#allocation10], 16
    $region45: #{tpu_custom_call.1} parent=1 // pred_fallthru
      _
    // Predicated region
    $region46: #{tpu_custom_call.1} parent=1 // pred_check
      _
    $region47: #{tpu_custom_call.1} parent=1 // pred_check_branch
      %92 = sbr.rel (0) target = $region49
    $region48: #{tpu_custom_call.1} parent=1 // pred_region
      %93 = dma.done [#allocation13], 16
    $region49: #{tpu_custom_call.1} parent=1 // pred_fallthru
      _
    %v94 = vld [vmem:[#allocation3] sm:$0xff]
    %v95 = vld [vmem:[#allocation6] sm:$0xff]
    %96 = vxpose.xlu0.b32.start [1/16] %v94, 128
    %97 = vxpose.xlu0.b32.cont [2/16] 0.0, 128
    %98 = vxpose.xlu0.b32.cont [3/16] 0.0, 128
    %99 = vxpose.xlu0.b32.cont [4/16] 0.0, 128
    %100 = vxpose.xlu0.b32.cont [5/16] 0.0, 128
    %101 = vxpose.xlu0.b32.cont [6/16] 0.0, 128
    %102 = vxpose.xlu0.b32.cont [7/16] 0.0, 128
    %103 = vxpose.xlu0.b32.cont [8/16] 0.0, 128
    %104 = vxpose.xlu0.b32.cont [9/16] 0.0, 128
    %105 = vxpose.xlu0.b32.cont [10/16] 0.0, 128
    %106 = vxpose.xlu0.b32.cont [11/16] 0.0, 128
    %107 = vxpose.xlu0.b32.cont [12/16] 0.0, 128
    %108 = vxpose.xlu0.b32.cont [13/16] 0.0, 128
    %109 = vxpose.xlu0.b32.cont [14/16] 0.0, 128
    %110 = vxpose.xlu0.b32.cont [15/16] 0.0, 128
    %111 = vxpose.xlu0.b32.end [16/16] 0.0, 128
    %v112 = vpop.trf.xlu0
    %v113 = vpop.trf.xlu0
    %v114 = vpop.trf.xlu0
    %v115 = vpop.trf.xlu0
    %v116 = vpop.trf.xlu0
    %v117 = vpop.trf.xlu0
    %v118 = vpop.trf.xlu0
    %v119 = vpop.trf.xlu0
    %v120 = vpop.trf.xlu0
    %v121 = vpop.trf.xlu0
    %v122 = vpop.trf.xlu0
    %v123 = vpop.trf.xlu0
    %v124 = vpop.trf.xlu0
    %v125 = vpop.trf.xlu0
    %v126 = vpop.trf.xlu0
    %v127 = vpop.trf.xlu0
    %vm128 = vcmask 64512
    %v130 = vsel %vm128, %v112, 0
    %v133 = vsel %vm128, %v113, 0
    %v136 = vsel %vm128, %v114, 0
    %v139 = vsel %vm128, %v115, 0
    %v142 = vsel %vm128, %v116, 0
    %v145 = vsel %vm128, %v117, 0
    %v148 = vsel %vm128, %v118, 0
    %v151 = vsel %vm128, %v119, 0
    %v154 = vsel %vm128, %v120, 0
    %v157 = vsel %vm128, %v121, 0
    %v160 = vsel %vm128, %v122, 0
    %v163 = vsel %vm128, %v123, 0
    %v166 = vsel %vm128, %v124, 0
    %v169 = vsel %vm128, %v125, 0
    %v172 = vsel %vm128, %v126, 0
    %v175 = vsel %vm128, %v127, 0
    %177 = vmatprep.subr.mxu0 0.0
    %178 = vmatpush1.msra.mxu0 %v95
    %179 = vmatprep.subr.mxu0 0.0
    %180 = vmatpush1.msra.mxu0 0.0
    %181 = vmatprep.subr.mxu0 0.0
    %182 = vmatpush1.msra.mxu0 0.0
    %183 = vmatprep.subr.mxu0 0.0
    %184 = vmatpush1.msra.mxu0 0.0
    %185 = vmatprep.subr.mxu0 0.0
    %186 = vmatpush1.msra.mxu0 0.0
    %187 = vmatprep.subr.mxu0 0.0
    %188 = vmatpush1.msra.mxu0 0.0
    %189 = vmatprep.subr.mxu0 0.0
    %190 = vmatpush1.msra.mxu0 0.0
    %191 = vmatprep.subr.mxu0 0.0
    %192 = vmatpush1.msra.mxu0 0.0
    %193 = vmatprep.subr.mxu0 0.0
    %194 = vmatpush1.msra.mxu0 0.0
    %195 = vmatprep.subr.mxu0 0.0
    %196 = vmatpush1.msra.mxu0 0.0
    %197 = vmatprep.subr.mxu0 0.0
    %198 = vmatpush1.msra.mxu0 0.0
    %199 = vmatprep.subr.mxu0 0.0
    %200 = vmatpush1.msra.mxu0 0.0
    %201 = vmatprep.subr.mxu0 0.0
    %202 = vmatpush1.msra.mxu0 0.0
    %203 = vmatprep.subr.mxu0 0.0
    %204 = vmatpush1.msra.mxu0 0.0
    %205 = vmatprep.subr.mxu0 0.0
    %206 = vmatpush1.msra.mxu0 0.0
    %207 = vmatprep.subr.mxu0 0.0
    %208 = vmatpush1.msra.mxu0 0.0
    %209 = vmatprep.subr.mxu0 0.0
    %210 = vmatpush1.msra.mxu0 0.0
    %211 = vmatprep.subr.mxu0 0.0
    %212 = vmatpush1.msra.mxu0 0.0
    %213 = vmatprep.subr.mxu0 0.0
    %214 = vmatpush1.msra.mxu0 0.0
    %215 = vmatprep.subr.mxu0 0.0
    %216 = vmatpush1.msra.mxu0 0.0
    %217 = vmatprep.subr.mxu0 0.0
    %218 = vmatpush1.msra.mxu0 0.0
    %219 = vmatprep.subr.mxu0 0.0
    %220 = vmatpush1.msra.mxu0 0.0
    %221 = vmatprep.subr.mxu0 0.0
    %222 = vmatpush1.msra.mxu0 0.0
    %223 = vmatprep.subr.mxu0 0.0
    %224 = vmatpush1.msra.mxu0 0.0
    %225 = vmatprep.subr.mxu0 0.0
    %226 = vmatpush1.msra.mxu0 0.0
    %227 = vmatprep.subr.mxu0 0.0
    %228 = vmatpush1.msra.mxu0 0.0
    %229 = vmatprep.subr.mxu0 0.0
    %230 = vmatpush1.msra.mxu0 0.0
    %231 = vmatprep.subr.mxu0 0.0
    %232 = vmatpush1.msra.mxu0 0.0
    %233 = vmatprep.subr.mxu0 0.0
    %234 = vmatpush1.msra.mxu0 0.0
    %235 = vmatprep.subr.mxu0 0.0
    %236 = vmatpush1.msra.mxu0 0.0
    %237 = vmatprep.subr.mxu0 0.0
    %238 = vmatpush1.msra.mxu0 0.0
    %239 = vmatprep.subr.mxu0 0.0
    %240 = vmatpush1.msra.mxu0 0.0
    %241 = vmatprep.mubr.f32.mxu0 0.0
    %242 = vmatmul.mubr.f32.gmra.mrb[0].mxu0 %v130
    %v243 = vpop.f32.mrb[0].mxu0
    %v244 = vadd.f32 0.0, %v243
    %v245 = vpop.f32.mrb[0].mxu0
    %246 = vmatprep.mubr.f32.mxu0 0.0
    %247 = vmatmul.mubr.f32.gmra.mrb[0].mxu0 %v133
    %v248 = vpop.f32.mrb[0].mxu0
    %v249 = vadd.f32 0.0, %v248
    %v250 = vpop.f32.mrb[0].mxu0
    %251 = vmatprep.mubr.f32.mxu0 0.0
    %252 = vmatmul.mubr.f32.gmra.mrb[0].mxu0 %v136
    %v253 = vpop.f32.mrb[0].mxu0
    %v254 = vadd.f32 0.0, %v253
    %v255 = vpop.f32.mrb[0].mxu0
    %256 = vmatprep.mubr.f32.mxu0 0.0
    %257 = vmatmul.mubr.f32.gmra.mrb[0].mxu0 %v139
    %v258 = vpop.f32.mrb[0].mxu0
    %v259 = vadd.f32 0.0, %v258
    %v260 = vpop.f32.mrb[0].mxu0
    %261 = vmatprep.mubr.f32.mxu0 0.0
    %262 = vmatmul.mubr.f32.gmra.mrb[0].mxu0 %v142
    %v263 = vpop.f32.mrb[0].mxu0
    %v264 = vadd.f32 0.0, %v263
    %v265 = vpop.f32.mrb[0].mxu0
    %266 = vmatprep.mubr.f32.mxu0 0.0
    %267 = vmatmul.mubr.f32.gmra.mrb[0].mxu0 %v145
    %v268 = vpop.f32.mrb[0].mxu0
    %v269 = vadd.f32 0.0, %v268
    %v270 = vpop.f32.mrb[0].mxu0
    %271 = vmatprep.mubr.f32.mxu0 0.0
    %272 = vmatmul.mubr.f32.gmra.mrb[0].mxu0 %v148
    %v273 = vpop.f32.mrb[0].mxu0
    %v274 = vadd.f32 0.0, %v273
    %v275 = vpop.f32.mrb[0].mxu0
    %276 = vmatprep.mubr.f32.mxu0 0.0
    %277 = vmatmul.mubr.f32.gmra.mrb[0].mxu0 %v151
    %v278 = vpop.f32.mrb[0].mxu0
    %v279 = vadd.f32 0.0, %v278
    %v280 = vpop.f32.mrb[0].mxu0
    %281 = vmatprep.mubr.f32.mxu0 0.0
    %282 = vmatmul.mubr.f32.gmra.mrb[0].mxu0 %v154
    %v283 = vpop.f32.mrb[0].mxu0
    %v284 = vadd.f32 0.0, %v283
    %v285 = vpop.f32.mrb[0].mxu0
    %286 = vmatprep.mubr.f32.mxu0 0.0
    %287 = vmatmul.mubr.f32.gmra.mrb[0].mxu0 %v157
    %v288 = vpop.f32.mrb[0].mxu0
    %v289 = vadd.f32 0.0, %v288
    %v290 = vpop.f32.mrb[0].mxu0
    %291 = vmatprep.mubr.f32.mxu0 0.0
    %292 = vmatmul.mubr.f32.gmra.mrb[0].mxu0 %v160
    %v293 = vpop.f32.mrb[0].mxu0
    %v294 = vadd.f32 0.0, %v293
    %v295 = vpop.f32.mrb[0].mxu0
    %296 = vmatprep.mubr.f32.mxu0 0.0
    %297 = vmatmul.mubr.f32.gmra.mrb[0].mxu0 %v163
    %v298 = vpop.f32.mrb[0].mxu0
    %v299 = vadd.f32 0.0, %v298
    %v300 = vpop.f32.mrb[0].mxu0
    %301 = vmatprep.mubr.f32.mxu0 0.0
    %302 = vmatmul.mubr.f32.gmra.mrb[0].mxu0 %v166
    %v303 = vpop.f32.mrb[0].mxu0
    %v304 = vadd.f32 0.0, %v303
    %v305 = vpop.f32.mrb[0].mxu0
    %306 = vmatprep.mubr.f32.mxu0 0.0
    %307 = vmatmul.mubr.f32.gmra.mrb[0].mxu0 %v169
    %v308 = vpop.f32.mrb[0].mxu0
    %v309 = vadd.f32 0.0, %v308
    %v310 = vpop.f32.mrb[0].mxu0
    %311 = vmatprep.mubr.f32.mxu0 0.0
    %312 = vmatmul.mubr.f32.gmra.mrb[0].mxu0 %v172
    %v313 = vpop.f32.mrb[0].mxu0
    %v314 = vadd.f32 0.0, %v313
    %v315 = vpop.f32.mrb[0].mxu0
    %316 = vmatprep.mubr.f32.mxu0 0.0
    %317 = vmatmul.mubr.f32.gmra.mrb[0].mxu0 %v175
    %v318 = vpop.f32.mrb[0].mxu0
    %v319 = vadd.f32 0.0, %v318
    %v320 = vpop.f32.mrb[0].mxu0
    %321 = vdwg.mxu0
    %p322 = scmp.eq.s32.totalorder 0, 0
    // Predicated region
    $region50: #{tpu_custom_call.1} parent=1 // pred_check
      %p323 = pneg %p322
    $region51: #{tpu_custom_call.1} parent=1 // pred_check_branch
      %325 = sbr.rel (%p323) target = $region53
    $region52: #{tpu_custom_call.1} parent=1 // pred_region
      %326 = vst [vmem:[#allocation2] sm:$0xff] %v244
      %327 = vst [vmem:[#allocation2 + $0x8] sm:$0xff] %v249
      %328 = vst [vmem:[#allocation2 + $0x10] sm:$0xff] %v254
      %329 = vst [vmem:[#allocation2 + $0x18] sm:$0xff] %v259
      %330 = vst [vmem:[#allocation2 + $0x20] sm:$0xff] %v264
      %331 = vst [vmem:[#allocation2 + $0x28] sm:$0xff] %v269
      %332 = vst [vmem:[#allocation2 + $0x30] sm:$0xff] %v274
      %333 = vst [vmem:[#allocation2 + $0x38] sm:$0xff] %v279
      %334 = vst [vmem:[#allocation2 + $0x40] sm:$0xff] %v284
      %335 = vst [vmem:[#allocation2 + $0x48] sm:$0xff] %v289
      %336 = vst [vmem:[#allocation2 + $0x50] sm:$0xff] %v294
      %337 = vst [vmem:[#allocation2 + $0x58] sm:$0xff] %v299
      %338 = vst [vmem:[#allocation2 + $0x60] sm:$0xff] %v304
      %339 = vst [vmem:[#allocation2 + $0x68] sm:$0xff] %v309
      %340 = vst [vmem:[#allocation2 + $0x70] sm:$0xff] %v314
      %341 = vst [vmem:[#allocation2 + $0x78] sm:$0xff] %v319
    $region53: #{tpu_custom_call.1} parent=1 // pred_fallthru
      _
    %p342 = scmp.ne.s32.totalorder 0, 0
    // Predicated region
    $region54: #{tpu_custom_call.1} parent=1 // pred_check
      %p343 = pneg %p342
    $region55: #{tpu_custom_call.1} parent=1 // pred_check_branch
      %345 = sbr.rel (%p343) target = $region57
    $region56: #{tpu_custom_call.1} parent=1 // pred_region
      %v346 = vld [vmem:[#allocation2] sm:$0xff]
      %v347 = vld [vmem:[#allocation2 + $0x8] sm:$0xff]
      %v348 = vld [vmem:[#allocation2 + $0x10] sm:$0xff]
      %v349 = vld [vmem:[#allocation2 + $0x18] sm:$0xff]
      %v350 = vld [vmem:[#allocation2 + $0x20] sm:$0xff]
      %v351 = vld [vmem:[#allocation2 + $0x28] sm:$0xff]
      %v352 = vld [vmem:[#allocation2 + $0x30] sm:$0xff]
      %v353 = vld [vmem:[#allocation2 + $0x38] sm:$0xff]
      %v354 = vld [vmem:[#allocation2 + $0x40] sm:$0xff]
      %v355 = vld [vmem:[#allocation2 + $0x48] sm:$0xff]
      %v356 = vld [vmem:[#allocation2 + $0x50] sm:$0xff]
      %v357 = vld [vmem:[#allocation2 + $0x58] sm:$0xff]
      %v358 = vld [vmem:[#allocation2 + $0x60] sm:$0xff]
      %v359 = vld [vmem:[#allocation2 + $0x68] sm:$0xff]
      %v360 = vld [vmem:[#allocation2 + $0x70] sm:$0xff]
      %v361 = vld [vmem:[#allocation2 + $0x78] sm:$0xff]
      %v362 = vadd.f32 %v346, %v244
      %v363 = vadd.f32 %v347, %v249
      %v364 = vadd.f32 %v348, %v254
      %v365 = vadd.f32 %v349, %v259
      %v366 = vadd.f32 %v350, %v264
      %v367 = vadd.f32 %v351, %v269
      %v368 = vadd.f32 %v352, %v274
      %v369 = vadd.f32 %v353, %v279
      %v370 = vadd.f32 %v354, %v284
      %v371 = vadd.f32 %v355, %v289
      %v372 = vadd.f32 %v356, %v294
      %v373 = vadd.f32 %v357, %v299
      %v374 = vadd.f32 %v358, %v304
      %v375 = vadd.f32 %v359, %v309
      %v376 = vadd.f32 %v360, %v314
      %v377 = vadd.f32 %v361, %v319
      %378 = vst [vmem:[#allocation2] sm:$0xff] %v362
      %379 = vst [vmem:[#allocation2 + $0x8] sm:$0xff] %v363
      %380 = vst [vmem:[#allocation2 + $0x10] sm:$0xff] %v364
      %381 = vst [vmem:[#allocation2 + $0x18] sm:$0xff] %v365
      %382 = vst [vmem:[#allocation2 + $0x20] sm:$0xff] %v366
      %383 = vst [vmem:[#allocation2 + $0x28] sm:$0xff] %v367
      %384 = vst [vmem:[#allocation2 + $0x30] sm:$0xff] %v368
      %385 = vst [vmem:[#allocation2 + $0x38] sm:$0xff] %v369
      %386 = vst [vmem:[#allocation2 + $0x40] sm:$0xff] %v370
      %387 = vst [vmem:[#allocation2 + $0x48] sm:$0xff] %v371
      %388 = vst [vmem:[#allocation2 + $0x50] sm:$0xff] %v372
      %389 = vst [vmem:[#allocation2 + $0x58] sm:$0xff] %v373
      %390 = vst [vmem:[#allocation2 + $0x60] sm:$0xff] %v374
      %391 = vst [vmem:[#allocation2 + $0x68] sm:$0xff] %v375
      %392 = vst [vmem:[#allocation2 + $0x70] sm:$0xff] %v376
      %393 = vst [vmem:[#allocation2 + $0x78] sm:$0xff] %v377
    $region57: #{tpu_custom_call.1} parent=1 // pred_fallthru
      _
    %p394 = scmp.ne.s32.totalorder 0, 0
    %p395 = pnand %p322, %p394
    %p396 = pneg %p395
    // Predicated region
    $region58: #{tpu_custom_call.1} parent=1 // pred_check
      _
    $region59: #{tpu_custom_call.1} parent=1 // pred_check_branch
      %398 = sbr.rel (%p395) target = $region61
    $region60: #{tpu_custom_call.1} parent=1 // pred_region
      %v399 = vld [vmem:[#allocation2] sm:$0xff]
      %v400 = vld [vmem:[#allocation2 + $0x8] sm:$0xff]
      %v401 = vld [vmem:[#allocation2 + $0x10] sm:$0xff]
      %v402 = vld [vmem:[#allocation2 + $0x18] sm:$0xff]
      %v403 = vld [vmem:[#allocation2 + $0x20] sm:$0xff]
      %v404 = vld [vmem:[#allocation2 + $0x28] sm:$0xff]
      %v405 = vld [vmem:[#allocation2 + $0x30] sm:$0xff]
      %v406 = vld [vmem:[#allocation2 + $0x38] sm:$0xff]
      %v407 = vld [vmem:[#allocation2 + $0x40] sm:$0xff]
      %v408 = vld [vmem:[#allocation2 + $0x48] sm:$0xff]
      %v409 = vld [vmem:[#allocation2 + $0x50] sm:$0xff]
      %v410 = vld [vmem:[#allocation2 + $0x58] sm:$0xff]
      %v411 = vld [vmem:[#allocation2 + $0x60] sm:$0xff]
      %v412 = vld [vmem:[#allocation2 + $0x68] sm:$0xff]
      %v413 = vld [vmem:[#allocation2 + $0x70] sm:$0xff]
      %v414 = vld [vmem:[#allocation2 + $0x78] sm:$0xff]
      %v415 = vmul.f32 %v399, 0.125
      %v416 = vmul.f32 %v400, 0.125
      %v417 = vmul.f32 %v401, 0.125
      %v418 = vmul.f32 %v402, 0.125
      %v419 = vmul.f32 %v403, 0.125
      %v420 = vmul.f32 %v404, 0.125
      %v421 = vmul.f32 %v405, 0.125
      %v422 = vmul.f32 %v406, 0.125
      %v423 = vmul.f32 %v407, 0.125
      %v424 = vmul.f32 %v408, 0.125
      %v425 = vmul.f32 %v409, 0.125
      %v426 = vmul.f32 %v410, 0.125
      %v427 = vmul.f32 %v411, 0.125
      %v428 = vmul.f32 %v412, 0.125
      %v429 = vmul.f32 %v413, 0.125
      %v430 = vmul.f32 %v414, 0.125
      %v431 = vld [vmem:[#allocation8] sm:$0x1]
      %v432 = vld [vmem:[#allocation11] sm:$0x1]
      %433 = vxpose.xlu0.b32.start [1/16] %v431, 128
      %434 = vxpose.xlu0.b32.cont [2/16] 0.0, 128
      %435 = vxpose.xlu0.b32.cont [3/16] 0.0, 128
      %436 = vxpose.xlu0.b32.cont [4/16] 0.0, 128
      %437 = vxpose.xlu0.b32.cont [5/16] 0.0, 128
      %438 = vxpose.xlu0.b32.cont [6/16] 0.0, 128
      %439 = vxpose.xlu0.b32.cont [7/16] 0.0, 128
      %440 = vxpose.xlu0.b32.cont [8/16] 0.0, 128
      %441 = vxpose.xlu0.b32.cont [9/16] 0.0, 128
      %442 = vxpose.xlu0.b32.cont [10/16] 0.0, 128
      %443 = vxpose.xlu0.b32.cont [11/16] 0.0, 128
      %444 = vxpose.xlu0.b32.cont [12/16] 0.0, 128
      %445 = vxpose.xlu0.b32.cont [13/16] 0.0, 128
      %446 = vxpose.xlu0.b32.cont [14/16] 0.0, 128
      %447 = vxpose.xlu0.b32.cont [15/16] 0.0, 128
      %448 = vxpose.xlu0.b32.end [16/16] 0.0, 128
      %v449 = vpop.trf.xlu0
      %v450 = vpop.trf.xlu0
      %v451 = vpop.trf.xlu0
      %v452 = vpop.trf.xlu0
      %v453 = vpop.trf.xlu0
      %v454 = vpop.trf.xlu0
      %v455 = vpop.trf.xlu0
      %v456 = vpop.trf.xlu0
      %v457 = vpop.trf.xlu0
      %v458 = vpop.trf.xlu0
      %v459 = vpop.trf.xlu0
      %v460 = vpop.trf.xlu0
      %v461 = vpop.trf.xlu0
      %v462 = vpop.trf.xlu0
      %v463 = vpop.trf.xlu0
      %v464 = vpop.trf.xlu0
      %vm465 = vcmask 7168
      %v467 = vsel %vm465, %v449, 0
      %v470 = vsel %vm465, %v450, 0
      %v473 = vsel %vm465, %v451, 0
      %v476 = vsel %vm465, %v452, 0
      %v479 = vsel %vm465, %v453, 0
      %v482 = vsel %vm465, %v454, 0
      %v485 = vsel %vm465, %v455, 0
      %v488 = vsel %vm465, %v456, 0
      %v491 = vsel %vm465, %v457, 0
      %v494 = vsel %vm465, %v458, 0
      %v497 = vsel %vm465, %v459, 0
      %v500 = vsel %vm465, %v460, 0
      %v503 = vsel %vm465, %v461, 0
      %v506 = vsel %vm465, %v462, 0
      %v509 = vsel %vm465, %v463, 0
      %v512 = vsel %vm465, %v464, 0
      %vm514 = vcmask 1040384
      %v516 = vsel %vm514, %v432, 0
      %518 = vmatprep.subr.mxu0 0.0
      %519 = vmatpush1.msra.mxu0 %v516
      %520 = vmatprep.subr.mxu0 0.0
      %521 = vmatpush1.msra.mxu0 0.0
      %522 = vmatprep.subr.mxu0 0.0
      %523 = vmatpush1.msra.mxu0 0.0
      %524 = vmatprep.subr.mxu0 0.0
      %525 = vmatpush1.msra.mxu0 0.0
      %526 = vmatprep.subr.mxu0 0.0
      %527 = vmatpush1.msra.mxu0 0.0
      %528 = vmatprep.subr.mxu0 0.0
      %529 = vmatpush1.msra.mxu0 0.0
      %530 = vmatprep.subr.mxu0 0.0
      %531 = vmatpush1.msra.mxu0 0.0
      %532 = vmatprep.subr.mxu0 0.0
      %533 = vmatpush1.msra.mxu0 0.0
      %534 = vmatprep.subr.mxu0 0.0
      %535 = vmatpush1.msra.mxu0 0.0
      %536 = vmatprep.subr.mxu0 0.0
      %537 = vmatpush1.msra.mxu0 0.0
      %538 = vmatprep.subr.mxu0 0.0
      %539 = vmatpush1.msra.mxu0 0.0
      %540 = vmatprep.subr.mxu0 0.0
      %541 = vmatpush1.msra.mxu0 0.0
      %542 = vmatprep.subr.mxu0 0.0
      %543 = vmatpush1.msra.mxu0 0.0
      %544 = vmatprep.subr.mxu0 0.0
      %545 = vmatpush1.msra.mxu0 0.0
      %546 = vmatprep.subr.mxu0 0.0
      %547 = vmatpush1.msra.mxu0 0.0
      %548 = vmatprep.subr.mxu0 0.0
      %549 = vmatpush1.msra.mxu0 0.0
      %550 = vmatprep.subr.mxu0 0.0
      %551 = vmatpush1.msra.mxu0 0.0
      %552 = vmatprep.subr.mxu0 0.0
      %553 = vmatpush1.msra.mxu0 0.0
      %554 = vmatprep.subr.mxu0 0.0
      %555 = vmatpush1.msra.mxu0 0.0
      %556 = vmatprep.subr.mxu0 0.0
      %557 = vmatpush1.msra.mxu0 0.0
      %558 = vmatprep.subr.mxu0 0.0
      %559 = vmatpush1.msra.mxu0 0.0
      %560 = vmatprep.subr.mxu0 0.0
      %561 = vmatpush1.msra.mxu0 0.0
      %562 = vmatprep.subr.mxu0 0.0
      %563 = vmatpush1.msra.mxu0 0.0
      %564 = vmatprep.subr.mxu0 0.0
      %565 = vmatpush1.msra.mxu0 0.0
      %566 = vmatprep.subr.mxu0 0.0
      %567 = vmatpush1.msra.mxu0 0.0
      %568 = vmatprep.subr.mxu0 0.0
      %569 = vmatpush1.msra.mxu0 0.0
      %570 = vmatprep.subr.mxu0 0.0
      %571 = vmatpush1.msra.mxu0 0.0
      %572 = vmatprep.subr.mxu0 0.0
      %573 = vmatpush1.msra.mxu0 0.0
      %574 = vmatprep.subr.mxu0 0.0
      %575 = vmatpush1.msra.mxu0 0.0
      %576 = vmatprep.subr.mxu0 0.0
      %577 = vmatpush1.msra.mxu0 0.0
      %578 = vmatprep.subr.mxu0 0.0
      %579 = vmatpush1.msra.mxu0 0.0
      %580 = vmatprep.subr.mxu0 0.0
      %581 = vmatpush1.msra.mxu0 0.0
      %582 = vmatprep.mubr.f32.mxu0 0.0
      %583 = vmatmul.mubr.f32.gmra.mrb[0].mxu0 %v467
      %v584 = vpop.f32.mrb[0].mxu0
      %v585 = vadd.f32 0.0, %v584
      %v586 = vpop.f32.mrb[0].mxu0
      %587 = vmatprep.mubr.f32.mxu0 0.0
      %588 = vmatmul.mubr.f32.gmra.mrb[0].mxu0 %v470
      %v589 = vpop.f32.mrb[0].mxu0
      %v590 = vadd.f32 0.0, %v589
      %v591 = vpop.f32.mrb[0].mxu0
      %592 = vmatprep.mubr.f32.mxu0 0.0
      %593 = vmatmul.mubr.f32.gmra.mrb[0].mxu0 %v473
      %v594 = vpop.f32.mrb[0].mxu0
      %v595 = vadd.f32 0.0, %v594
      %v596 = vpop.f32.mrb[0].mxu0
      %597 = vmatprep.mubr.f32.mxu0 0.0
      %598 = vmatmul.mubr.f32.gmra.mrb[0].mxu0 %v476
      %v599 = vpop.f32.mrb[0].mxu0
      %v600 = vadd.f32 0.0, %v599
      %v601 = vpop.f32.mrb[0].mxu0
      %602 = vmatprep.mubr.f32.mxu0 0.0
      %603 = vmatmul.mubr.f32.gmra.mrb[0].mxu0 %v479
      %v604 = vpop.f32.mrb[0].mxu0
      %v605 = vadd.f32 0.0, %v604
      %v606 = vpop.f32.mrb[0].mxu0
      %607 = vmatprep.mubr.f32.mxu0 0.0
      %608 = vmatmul.mubr.f32.gmra.mrb[0].mxu0 %v482
      %v609 = vpop.f32.mrb[0].mxu0
      %v610 = vadd.f32 0.0, %v609
      %v611 = vpop.f32.mrb[0].mxu0
      %612 = vmatprep.mubr.f32.mxu0 0.0
      %613 = vmatmul.mubr.f32.gmra.mrb[0].mxu0 %v485
      %v614 = vpop.f32.mrb[0].mxu0
      %v615 = vadd.f32 0.0, %v614
      %v616 = vpop.f32.mrb[0].mxu0
      %617 = vmatprep.mubr.f32.mxu0 0.0
      %618 = vmatmul.mubr.f32.gmra.mrb[0].mxu0 %v488
      %v619 = vpop.f32.mrb[0].mxu0
      %v620 = vadd.f32 0.0, %v619
      %v621 = vpop.f32.mrb[0].mxu0
      %622 = vmatprep.mubr.f32.mxu0 0.0
      %623 = vmatmul.mubr.f32.gmra.mrb[0].mxu0 %v491
      %v624 = vpop.f32.mrb[0].mxu0
      %v625 = vadd.f32 0.0, %v624
      %v626 = vpop.f32.mrb[0].mxu0
      %627 = vmatprep.mubr.f32.mxu0 0.0
      %628 = vmatmul.mubr.f32.gmra.mrb[0].mxu0 %v494
      %v629 = vpop.f32.mrb[0].mxu0
      %v630 = vadd.f32 0.0, %v629
      %v631 = vpop.f32.mrb[0].mxu0
      %632 = vmatprep.mubr.f32.mxu0 0.0
      %633 = vmatmul.mubr.f32.gmra.mrb[0].mxu0 %v497
      %v634 = vpop.f32.mrb[0].mxu0
      %v635 = vadd.f32 0.0, %v634
      %v636 = vpop.f32.mrb[0].mxu0
      %637 = vmatprep.mubr.f32.mxu0 0.0
      %638 = vmatmul.mubr.f32.gmra.mrb[0].mxu0 %v500
      %v639 = vpop.f32.mrb[0].mxu0
      %v640 = vadd.f32 0.0, %v639
      %v641 = vpop.f32.mrb[0].mxu0
      %642 = vmatprep.mubr.f32.mxu0 0.0
      %643 = vmatmul.mubr.f32.gmra.mrb[0].mxu0 %v503
      %v644 = vpop.f32.mrb[0].mxu0
      %v645 = vadd.f32 0.0, %v644
      %v646 = vpop.f32.mrb[0].mxu0
      %647 = vmatprep.mubr.f32.mxu0 0.0
      %648 = vmatmul.mubr.f32.gmra.mrb[0].mxu0 %v506
      %v649 = vpop.f32.mrb[0].mxu0
      %v650 = vadd.f32 0.0, %v649
      %v651 = vpop.f32.mrb[0].mxu0
      %652 = vmatprep.mubr.f32.mxu0 0.0
      %653 = vmatmul.mubr.f32.gmra.mrb[0].mxu0 %v509
      %v654 = vpop.f32.mrb[0].mxu0
      %v655 = vadd.f32 0.0, %v654
      %v656 = vpop.f32.mrb[0].mxu0
      %657 = vmatprep.mubr.f32.mxu0 0.0
      %658 = vmatmul.mubr.f32.gmra.mrb[0].mxu0 %v512
      %v659 = vpop.f32.mrb[0].mxu0
      %v660 = vadd.f32 0.0, %v659
      %v661 = vpop.f32.mrb[0].mxu0
      %662 = vdwg.mxu0
      %v663 = vsub.f32 %v415, %v585
      %v664 = vsub.f32 %v416, %v590
      %v665 = vsub.f32 %v417, %v595
      %v666 = vsub.f32 %v418, %v600
      %v667 = vsub.f32 %v419, %v605
      %v668 = vsub.f32 %v420, %v610
      %v669 = vsub.f32 %v421, %v615
      %v670 = vsub.f32 %v422, %v620
      %v671 = vsub.f32 %v423, %v625
      %v672 = vsub.f32 %v424, %v630
      %v673 = vsub.f32 %v425, %v635
      %v674 = vsub.f32 %v426, %v640
      %v675 = vsub.f32 %v427, %v645
      %v676 = vsub.f32 %v428, %v650
      %v677 = vsub.f32 %v429, %v655
      %v678 = vsub.f32 %v430, %v660
      %v679 = vld [vmem:[#allocation9] sm:$0x1]
      %v680 = vld [vmem:[#allocation12] sm:$0x1]
      %681 = vxpose.xlu0.b32.start [1/16] %v679, 128
      %682 = vxpose.xlu0.b32.cont [2/16] 0.0, 128
      %683 = vxpose.xlu0.b32.cont [3/16] 0.0, 128
      %684 = vxpose.xlu0.b32.cont [4/16] 0.0, 128
      %685 = vxpose.xlu0.b32.cont [5/16] 0.0, 128
      %686 = vxpose.xlu0.b32.cont [6/16] 0.0, 128
      %687 = vxpose.xlu0.b32.cont [7/16] 0.0, 128
      %688 = vxpose.xlu0.b32.cont [8/16] 0.0, 128
      %689 = vxpose.xlu0.b32.cont [9/16] 0.0, 128
      %690 = vxpose.xlu0.b32.cont [10/16] 0.0, 128
      %691 = vxpose.xlu0.b32.cont [11/16] 0.0, 128
      %692 = vxpose.xlu0.b32.cont [12/16] 0.0, 128
      %693 = vxpose.xlu0.b32.cont [13/16] 0.0, 128
      %694 = vxpose.xlu0.b32.cont [14/16] 0.0, 128
      %695 = vxpose.xlu0.b32.cont [15/16] 0.0, 128
      %696 = vxpose.xlu0.b32.end [16/16] 0.0, 128
      %v697 = vpop.trf.xlu0
      %v698 = vpop.trf.xlu0
      %v699 = vpop.trf.xlu0
      %v700 = vpop.trf.xlu0
      %v701 = vpop.trf.xlu0
      %v702 = vpop.trf.xlu0
      %v703 = vpop.trf.xlu0
      %v704 = vpop.trf.xlu0
      %v705 = vpop.trf.xlu0
      %v706 = vpop.trf.xlu0
      %v707 = vpop.trf.xlu0
      %v708 = vpop.trf.xlu0
      %v709 = vpop.trf.xlu0
      %v710 = vpop.trf.xlu0
      %v711 = vpop.trf.xlu0
      %v712 = vpop.trf.xlu0
      %v714 = vsel %vm465, %v697, 0
      %v717 = vsel %vm465, %v698, 0
      %v720 = vsel %vm465, %v699, 0
      %v723 = vsel %vm465, %v700, 0
      %v726 = vsel %vm465, %v701, 0
      %v729 = vsel %vm465, %v702, 0
      %v732 = vsel %vm465, %v703, 0
      %v735 = vsel %vm465, %v704, 0
      %v738 = vsel %vm465, %v705, 0
      %v741 = vsel %vm465, %v706, 0
      %v744 = vsel %vm465, %v707, 0
      %v747 = vsel %vm465, %v708, 0
      %v750 = vsel %vm465, %v709, 0
      %v753 = vsel %vm465, %v710, 0
      %v756 = vsel %vm465, %v711, 0
      %v759 = vsel %vm465, %v712, 0
      %v762 = vsel %vm514, %v680, 0
      %764 = vmatprep.subr.mxu0 0.0
      %765 = vmatpush1.msra.mxu0 %v762
      %766 = vmatprep.subr.mxu0 0.0
      %767 = vmatpush1.msra.mxu0 0.0
      %768 = vmatprep.subr.mxu0 0.0
      %769 = vmatpush1.msra.mxu0 0.0
      %770 = vmatprep.subr.mxu0 0.0
      %771 = vmatpush1.msra.mxu0 0.0
      %772 = vmatprep.subr.mxu0 0.0
      %773 = vmatpush1.msra.mxu0 0.0
      %774 = vmatprep.subr.mxu0 0.0
      %775 = vmatpush1.msra.mxu0 0.0
      %776 = vmatprep.subr.mxu0 0.0
      %777 = vmatpush1.msra.mxu0 0.0
      %778 = vmatprep.subr.mxu0 0.0
      %779 = vmatpush1.msra.mxu0 0.0
      %780 = vmatprep.subr.mxu0 0.0
      %781 = vmatpush1.msra.mxu0 0.0
      %782 = vmatprep.subr.mxu0 0.0
      %783 = vmatpush1.msra.mxu0 0.0
      %784 = vmatprep.subr.mxu0 0.0
      %785 = vmatpush1.msra.mxu0 0.0
      %786 = vmatprep.subr.mxu0 0.0
      %787 = vmatpush1.msra.mxu0 0.0
      %788 = vmatprep.subr.mxu0 0.0
      %789 = vmatpush1.msra.mxu0 0.0
      %790 = vmatprep.subr.mxu0 0.0
      %791 = vmatpush1.msra.mxu0 0.0
      %792 = vmatprep.subr.mxu0 0.0
      %793 = vmatpush1.msra.mxu0 0.0
      %794 = vmatprep.subr.mxu0 0.0
      %795 = vmatpush1.msra.mxu0 0.0
      %796 = vmatprep.subr.mxu0 0.0
      %797 = vmatpush1.msra.mxu0 0.0
      %798 = vmatprep.subr.mxu0 0.0
      %799 = vmatpush1.msra.mxu0 0.0
      %800 = vmatprep.subr.mxu0 0.0
      %801 = vmatpush1.msra.mxu0 0.0
      %802 = vmatprep.subr.mxu0 0.0
      %803 = vmatpush1.msra.mxu0 0.0
      %804 = vmatprep.subr.mxu0 0.0
      %805 = vmatpush1.msra.mxu0 0.0
      %806 = vmatprep.subr.mxu0 0.0
      %807 = vmatpush1.msra.mxu0 0.0
      %808 = vmatprep.subr.mxu0 0.0
      %809 = vmatpush1.msra.mxu0 0.0
      %810 = vmatprep.subr.mxu0 0.0
      %811 = vmatpush1.msra.mxu0 0.0
      %812 = vmatprep.subr.mxu0 0.0
      %813 = vmatpush1.msra.mxu0 0.0
      %814 = vmatprep.subr.mxu0 0.0
      %815 = vmatpush1.msra.mxu0 0.0
      %816 = vmatprep.subr.mxu0 0.0
      %817 = vmatpush1.msra.mxu0 0.0
      %818 = vmatprep.subr.mxu0 0.0
      %819 = vmatpush1.msra.mxu0 0.0
      %820 = vmatprep.subr.mxu0 0.0
      %821 = vmatpush1.msra.mxu0 0.0
      %822 = vmatprep.subr.mxu0 0.0
      %823 = vmatpush1.msra.mxu0 0.0
      %824 = vmatprep.subr.mxu0 0.0
      %825 = vmatpush1.msra.mxu0 0.0
      %826 = vmatprep.subr.mxu0 0.0
      %827 = vmatpush1.msra.mxu0 0.0
      %828 = vmatprep.mubr.f32.mxu0 0.0
      %829 = vmatmul.mubr.f32.gmra.mrb[0].mxu0 %v714
      %v830 = vpop.f32.mrb[0].mxu0
      %v831 = vadd.f32 0.0, %v830
      %v832 = vpop.f32.mrb[0].mxu0
      %833 = vmatprep.mubr.f32.mxu0 0.0
      %834 = vmatmul.mubr.f32.gmra.mrb[0].mxu0 %v717
      %v835 = vpop.f32.mrb[0].mxu0
      %v836 = vadd.f32 0.0, %v835
      %v837 = vpop.f32.mrb[0].mxu0
      %838 = vmatprep.mubr.f32.mxu0 0.0
      %839 = vmatmul.mubr.f32.gmra.mrb[0].mxu0 %v720
      %v840 = vpop.f32.mrb[0].mxu0
      %v841 = vadd.f32 0.0, %v840
      %v842 = vpop.f32.mrb[0].mxu0
      %843 = vmatprep.mubr.f32.mxu0 0.0
      %844 = vmatmul.mubr.f32.gmra.mrb[0].mxu0 %v723
      %v845 = vpop.f32.mrb[0].mxu0
      %v846 = vadd.f32 0.0, %v845
      %v847 = vpop.f32.mrb[0].mxu0
      %848 = vmatprep.mubr.f32.mxu0 0.0
      %849 = vmatmul.mubr.f32.gmra.mrb[0].mxu0 %v726
      %v850 = vpop.f32.mrb[0].mxu0
      %v851 = vadd.f32 0.0, %v850
      %v852 = vpop.f32.mrb[0].mxu0
      %853 = vmatprep.mubr.f32.mxu0 0.0
      %854 = vmatmul.mubr.f32.gmra.mrb[0].mxu0 %v729
      %v855 = vpop.f32.mrb[0].mxu0
      %v856 = vadd.f32 0.0, %v855
      %v857 = vpop.f32.mrb[0].mxu0
      %858 = vmatprep.mubr.f32.mxu0 0.0
      %859 = vmatmul.mubr.f32.gmra.mrb[0].mxu0 %v732
      %v860 = vpop.f32.mrb[0].mxu0
      %v861 = vadd.f32 0.0, %v860
      %v862 = vpop.f32.mrb[0].mxu0
      %863 = vmatprep.mubr.f32.mxu0 0.0
      %864 = vmatmul.mubr.f32.gmra.mrb[0].mxu0 %v735
      %v865 = vpop.f32.mrb[0].mxu0
      %v866 = vadd.f32 0.0, %v865
      %v867 = vpop.f32.mrb[0].mxu0
      %868 = vmatprep.mubr.f32.mxu0 0.0
      %869 = vmatmul.mubr.f32.gmra.mrb[0].mxu0 %v738
      %v870 = vpop.f32.mrb[0].mxu0
      %v871 = vadd.f32 0.0, %v870
      %v872 = vpop.f32.mrb[0].mxu0
      %873 = vmatprep.mubr.f32.mxu0 0.0
      %874 = vmatmul.mubr.f32.gmra.mrb[0].mxu0 %v741
      %v875 = vpop.f32.mrb[0].mxu0
      %v876 = vadd.f32 0.0, %v875
      %v877 = vpop.f32.mrb[0].mxu0
      %878 = vmatprep.mubr.f32.mxu0 0.0
      %879 = vmatmul.mubr.f32.gmra.mrb[0].mxu0 %v744
      %v880 = vpop.f32.mrb[0].mxu0
      %v881 = vadd.f32 0.0, %v880
      %v882 = vpop.f32.mrb[0].mxu0
      %883 = vmatprep.mubr.f32.mxu0 0.0
      %884 = vmatmul.mubr.f32.gmra.mrb[0].mxu0 %v747
      %v885 = vpop.f32.mrb[0].mxu0
      %v886 = vadd.f32 0.0, %v885
      %v887 = vpop.f32.mrb[0].mxu0
      %888 = vmatprep.mubr.f32.mxu0 0.0
      %889 = vmatmul.mubr.f32.gmra.mrb[0].mxu0 %v750
      %v890 = vpop.f32.mrb[0].mxu0
      %v891 = vadd.f32 0.0, %v890
      %v892 = vpop.f32.mrb[0].mxu0
      %893 = vmatprep.mubr.f32.mxu0 0.0
      %894 = vmatmul.mubr.f32.gmra.mrb[0].mxu0 %v753
      %v895 = vpop.f32.mrb[0].mxu0
      %v896 = vadd.f32 0.0, %v895
      %v897 = vpop.f32.mrb[0].mxu0
      %898 = vmatprep.mubr.f32.mxu0 0.0
      %899 = vmatmul.mubr.f32.gmra.mrb[0].mxu0 %v756
      %v900 = vpop.f32.mrb[0].mxu0
      %v901 = vadd.f32 0.0, %v900
      %v902 = vpop.f32.mrb[0].mxu0
      %903 = vmatprep.mubr.f32.mxu0 0.0
      %904 = vmatmul.mubr.f32.gmra.mrb[0].mxu0 %v759
      %v905 = vpop.f32.mrb[0].mxu0
      %v906 = vadd.f32 0.0, %v905
      %v907 = vpop.f32.mrb[0].mxu0
      %908 = vdwg.mxu0
      %v909 = vmul.f32 %v663, %v831
      %v910 = vmul.f32 %v664, %v836
      %v911 = vmul.f32 %v665, %v841
      %v912 = vmul.f32 %v666, %v846
      %v913 = vmul.f32 %v667, %v851
      %v914 = vmul.f32 %v668, %v856
      %v915 = vmul.f32 %v669, %v861
      %v916 = vmul.f32 %v670, %v866
      %v917 = vmul.f32 %v671, %v871
      %v918 = vmul.f32 %v672, %v876
      %v919 = vmul.f32 %v673, %v881
      %v920 = vmul.f32 %v674, %v886
      %v921 = vmul.f32 %v675, %v891
      %v922 = vmul.f32 %v676, %v896
      %v923 = vmul.f32 %v677, %v901
      %v924 = vmul.f32 %v678, %v906
      %v925 = vmul.f32 %v909, %v909
      %v926 = vmul.f32 %v910, %v910
      %v927 = vmul.f32 %v911, %v911
      %v928 = vmul.f32 %v912, %v912
      %v929 = vmul.f32 %v913, %v913
      %v930 = vmul.f32 %v914, %v914
      %v931 = vmul.f32 %v915, %v915
      %v932 = vmul.f32 %v916, %v916
      %v933 = vmul.f32 %v917, %v917
      %v934 = vmul.f32 %v918, %v918
      %v935 = vmul.f32 %v919, %v919
      %v936 = vmul.f32 %v920, %v920
      %v937 = vmul.f32 %v921, %v921
      %v938 = vmul.f32 %v922, %v922
      %v939 = vmul.f32 %v923, %v923
      %v940 = vmul.f32 %v924, %v924
      %v941 = vadd.f32 %v925, %v926
      %v942 = vadd.f32 %v941, %v927
      %v943 = vadd.f32 %v942, %v928
      %v944 = vadd.f32 %v943, %v929
      %v945 = vadd.f32 %v944, %v930
      %v946 = vadd.f32 %v945, %v931
      %v947 = vadd.f32 %v946, %v932
      %v948 = vadd.f32 %v947, %v933
      %v949 = vadd.f32 %v948, %v934
      %v950 = vadd.f32 %v949, %v935
      %v951 = vadd.f32 %v950, %v936
      %v952 = vadd.f32 %v951, %v937
      %v953 = vadd.f32 %v952, %v938
      %v954 = vadd.f32 %v953, %v939
      %v955 = vadd.f32 %v954, %v940
      %956 = vadd.xlane.f32.xlu0 %v955
      %v957 = vpop.xlane.xlu0 %956
      %v958 = vrot.slane %v957, 4
      %v959 = vadd.f32 %v957, %v958
      %v960 = vrot.slane %v959, 2
      %v961 = vadd.f32 %v959, %v960
      %v962 = vrot.slane %v961, 1
      %v963 = vadd.f32 %v961, %v962
      %s964 = vtos %v963
      %s965 = smul.f32 %s964, 0.005
      %v966 = vlaneseq
      %v967 = vshrl.u32 %v966, 7
      %v968 = vlaneseq
      %v969 = vand.u32 %v968, 127
      %vm970 = vcmp.eq.s32.totalorder %v967, 0
      %vm971 = vcmp.eq.s32.totalorder %v969, 0
      %vm972 = vmand %vm970, %vm971
      %v973 = vstv %s965
      %v974 = vsel %vm972, %v973, 0.0
      %975 = vst [vmem:[#allocation14] sm:$0xff] %v974
    $region61: #{tpu_custom_call.1} parent=1 // pred_fallthru
      _
    %p976 = scmp.eq.s32.totalorder 0, 0
    %p977 = pnand %p322, %p976
    %p978 = pneg %p977
    // Predicated region
    $region62: #{tpu_custom_call.1} parent=1 // pred_check
      _
    $region63: #{tpu_custom_call.1} parent=1 // pred_check_branch
      %980 = sbr.rel (%p977) target = $region65
    $region64: #{tpu_custom_call.1} parent=1 // pred_region
      %v981 = vld [vmem:[#allocation2] sm:$0xff]
      %v982 = vld [vmem:[#allocation2 + $0x8] sm:$0xff]
      %v983 = vld [vmem:[#allocation2 + $0x10] sm:$0xff]
      %v984 = vld [vmem:[#allocation2 + $0x18] sm:$0xff]
      %v985 = vld [vmem:[#allocation2 + $0x20] sm:$0xff]
      %v986 = vld [vmem:[#allocation2 + $0x28] sm:$0xff]
      %v987 = vld [vmem:[#allocation2 + $0x30] sm:$0xff]
      %v988 = vld [vmem:[#allocation2 + $0x38] sm:$0xff]
      %v989 = vld [vmem:[#allocation2 + $0x40] sm:$0xff]
      %v990 = vld [vmem:[#allocation2 + $0x48] sm:$0xff]
      %v991 = vld [vmem:[#allocation2 + $0x50] sm:$0xff]
      %v992 = vld [vmem:[#allocation2 + $0x58] sm:$0xff]
      %v993 = vld [vmem:[#allocation2 + $0x60] sm:$0xff]
      %v994 = vld [vmem:[#allocation2 + $0x68] sm:$0xff]
      %v995 = vld [vmem:[#allocation2 + $0x70] sm:$0xff]
      %v996 = vld [vmem:[#allocation2 + $0x78] sm:$0xff]
      %v997 = vmul.f32 %v981, 0.125
      %v998 = vmul.f32 %v982, 0.125
      %v999 = vmul.f32 %v983, 0.125
      %v1000 = vmul.f32 %v984, 0.125
      %v1001 = vmul.f32 %v985, 0.125
      %v1002 = vmul.f32 %v986, 0.125
      %v1003 = vmul.f32 %v987, 0.125
      %v1004 = vmul.f32 %v988, 0.125
      %v1005 = vmul.f32 %v989, 0.125
      %v1006 = vmul.f32 %v990, 0.125
      %v1007 = vmul.f32 %v991, 0.125
      %v1008 = vmul.f32 %v992, 0.125
      %v1009 = vmul.f32 %v993, 0.125
      %v1010 = vmul.f32 %v994, 0.125
      %v1011 = vmul.f32 %v995, 0.125
      %v1012 = vmul.f32 %v996, 0.125
      %v1013 = vld [vmem:[#allocation8] sm:$0x1]
      %v1014 = vld [vmem:[#allocation11] sm:$0x1]
      %1015 = vxpose.xlu0.b32.start [1/16] %v1013, 128
      %1016 = vxpose.xlu0.b32.cont [2/16] 0.0, 128
      %1017 = vxpose.xlu0.b32.cont [3/16] 0.0, 128
      %1018 = vxpose.xlu0.b32.cont [4/16] 0.0, 128
      %1019 = vxpose.xlu0.b32.cont [5/16] 0.0, 128
      %1020 = vxpose.xlu0.b32.cont [6/16] 0.0, 128
      %1021 = vxpose.xlu0.b32.cont [7/16] 0.0, 128
      %1022 = vxpose.xlu0.b32.cont [8/16] 0.0, 128
      %1023 = vxpose.xlu0.b32.cont [9/16] 0.0, 128
      %1024 = vxpose.xlu0.b32.cont [10/16] 0.0, 128
      %1025 = vxpose.xlu0.b32.cont [11/16] 0.0, 128
      %1026 = vxpose.xlu0.b32.cont [12/16] 0.0, 128
      %1027 = vxpose.xlu0.b32.cont [13/16] 0.0, 128
      %1028 = vxpose.xlu0.b32.cont [14/16] 0.0, 128
      %1029 = vxpose.xlu0.b32.cont [15/16] 0.0, 128
      %1030 = vxpose.xlu0.b32.end [16/16] 0.0, 128
      %v1031 = vpop.trf.xlu0
      %v1032 = vpop.trf.xlu0
      %v1033 = vpop.trf.xlu0
      %v1034 = vpop.trf.xlu0
      %v1035 = vpop.trf.xlu0
      %v1036 = vpop.trf.xlu0
      %v1037 = vpop.trf.xlu0
      %v1038 = vpop.trf.xlu0
      %v1039 = vpop.trf.xlu0
      %v1040 = vpop.trf.xlu0
      %v1041 = vpop.trf.xlu0
      %v1042 = vpop.trf.xlu0
      %v1043 = vpop.trf.xlu0
      %v1044 = vpop.trf.xlu0
      %v1045 = vpop.trf.xlu0
      %v1046 = vpop.trf.xlu0
      %vm1047 = vcmask 7168
      %v1049 = vsel %vm1047, %v1031, 0
      %v1052 = vsel %vm1047, %v1032, 0
      %v1055 = vsel %vm1047, %v1033, 0
      %v1058 = vsel %vm1047, %v1034, 0
      %v1061 = vsel %vm1047, %v1035, 0
      %v1064 = vsel %vm1047, %v1036, 0
      %v1067 = vsel %vm1047, %v1037, 0
      %v1070 = vsel %vm1047, %v1038, 0
      %v1073 = vsel %vm1047, %v1039, 0
      %v1076 = vsel %vm1047, %v1040, 0
      %v1079 = vsel %vm1047, %v1041, 0
      %v1082 = vsel %vm1047, %v1042, 0
      %v1085 = vsel %vm1047, %v1043, 0
      %v1088 = vsel %vm1047, %v1044, 0
      %v1091 = vsel %vm1047, %v1045, 0
      %v1094 = vsel %vm1047, %v1046, 0
      %vm1096 = vcmask 1040384
      %v1098 = vsel %vm1096, %v1014, 0
      %1100 = vmatprep.subr.mxu0 0.0
      %1101 = vmatpush1.msra.mxu0 %v1098
      %1102 = vmatprep.subr.mxu0 0.0
      %1103 = vmatpush1.msra.mxu0 0.0
      %1104 = vmatprep.subr.mxu0 0.0
      %1105 = vmatpush1.msra.mxu0 0.0
      %1106 = vmatprep.subr.mxu0 0.0
      %1107 = vmatpush1.msra.mxu0 0.0
      %1108 = vmatprep.subr.mxu0 0.0
      %1109 = vmatpush1.msra.mxu0 0.0
      %1110 = vmatprep.subr.mxu0 0.0
      %1111 = vmatpush1.msra.mxu0 0.0
      %1112 = vmatprep.subr.mxu0 0.0
      %1113 = vmatpush1.msra.mxu0 0.0
      %1114 = vmatprep.subr.mxu0 0.0
      %1115 = vmatpush1.msra.mxu0 0.0
      %1116 = vmatprep.subr.mxu0 0.0
      %1117 = vmatpush1.msra.mxu0 0.0
      %1118 = vmatprep.subr.mxu0 0.0
      %1119 = vmatpush1.msra.mxu0 0.0
      %1120 = vmatprep.subr.mxu0 0.0
      %1121 = vmatpush1.msra.mxu0 0.0
      %1122 = vmatprep.subr.mxu0 0.0
      %1123 = vmatpush1.msra.mxu0 0.0
      %1124 = vmatprep.subr.mxu0 0.0
      %1125 = vmatpush1.msra.mxu0 0.0
      %1126 = vmatprep.subr.mxu0 0.0
      %1127 = vmatpush1.msra.mxu0 0.0
      %1128 = vmatprep.subr.mxu0 0.0
      %1129 = vmatpush1.msra.mxu0 0.0
      %1130 = vmatprep.subr.mxu0 0.0
      %1131 = vmatpush1.msra.mxu0 0.0
      %1132 = vmatprep.subr.mxu0 0.0
      %1133 = vmatpush1.msra.mxu0 0.0
      %1134 = vmatprep.subr.mxu0 0.0
      %1135 = vmatpush1.msra.mxu0 0.0
      %1136 = vmatprep.subr.mxu0 0.0
      %1137 = vmatpush1.msra.mxu0 0.0
      %1138 = vmatprep.subr.mxu0 0.0
      %1139 = vmatpush1.msra.mxu0 0.0
      %1140 = vmatprep.subr.mxu0 0.0
      %1141 = vmatpush1.msra.mxu0 0.0
      %1142 = vmatprep.subr.mxu0 0.0
      %1143 = vmatpush1.msra.mxu0 0.0
      %1144 = vmatprep.subr.mxu0 0.0
      %1145 = vmatpush1.msra.mxu0 0.0
      %1146 = vmatprep.subr.mxu0 0.0
      %1147 = vmatpush1.msra.mxu0 0.0
      %1148 = vmatprep.subr.mxu0 0.0
      %1149 = vmatpush1.msra.mxu0 0.0
      %1150 = vmatprep.subr.mxu0 0.0
      %1151 = vmatpush1.msra.mxu0 0.0
      %1152 = vmatprep.subr.mxu0 0.0
      %1153 = vmatpush1.msra.mxu0 0.0
      %1154 = vmatprep.subr.mxu0 0.0
      %1155 = vmatpush1.msra.mxu0 0.0
      %1156 = vmatprep.subr.mxu0 0.0
      %1157 = vmatpush1.msra.mxu0 0.0
      %1158 = vmatprep.subr.mxu0 0.0
      %1159 = vmatpush1.msra.mxu0 0.0
      %1160 = vmatprep.subr.mxu0 0.0
      %1161 = vmatpush1.msra.mxu0 0.0
      %1162 = vmatprep.subr.mxu0 0.0
      %1163 = vmatpush1.msra.mxu0 0.0
      %1164 = vmatprep.mubr.f32.mxu0 0.0
      %1165 = vmatmul.mubr.f32.gmra.mrb[0].mxu0 %v1049
      %v1166 = vpop.f32.mrb[0].mxu0
      %v1167 = vadd.f32 0.0, %v1166
      %v1168 = vpop.f32.mrb[0].mxu0
      %1169 = vmatprep.mubr.f32.mxu0 0.0
      %1170 = vmatmul.mubr.f32.gmra.mrb[0].mxu0 %v1052
      %v1171 = vpop.f32.mrb[0].mxu0
      %v1172 = vadd.f32 0.0, %v1171
      %v1173 = vpop.f32.mrb[0].mxu0
      %1174 = vmatprep.mubr.f32.mxu0 0.0
      %1175 = vmatmul.mubr.f32.gmra.mrb[0].mxu0 %v1055
      %v1176 = vpop.f32.mrb[0].mxu0
      %v1177 = vadd.f32 0.0, %v1176
      %v1178 = vpop.f32.mrb[0].mxu0
      %1179 = vmatprep.mubr.f32.mxu0 0.0
      %1180 = vmatmul.mubr.f32.gmra.mrb[0].mxu0 %v1058
      %v1181 = vpop.f32.mrb[0].mxu0
      %v1182 = vadd.f32 0.0, %v1181
      %v1183 = vpop.f32.mrb[0].mxu0
      %1184 = vmatprep.mubr.f32.mxu0 0.0
      %1185 = vmatmul.mubr.f32.gmra.mrb[0].mxu0 %v1061
      %v1186 = vpop.f32.mrb[0].mxu0
      %v1187 = vadd.f32 0.0, %v1186
      %v1188 = vpop.f32.mrb[0].mxu0
      %1189 = vmatprep.mubr.f32.mxu0 0.0
      %1190 = vmatmul.mubr.f32.gmra.mrb[0].mxu0 %v1064
      %v1191 = vpop.f32.mrb[0].mxu0
      %v1192 = vadd.f32 0.0, %v1191
      %v1193 = vpop.f32.mrb[0].mxu0
      %1194 = vmatprep.mubr.f32.mxu0 0.0
      %1195 = vmatmul.mubr.f32.gmra.mrb[0].mxu0 %v1067
      %v1196 = vpop.f32.mrb[0].mxu0
      %v1197 = vadd.f32 0.0, %v1196
      %v1198 = vpop.f32.mrb[0].mxu0
      %1199 = vmatprep.mubr.f32.mxu0 0.0
      %1200 = vmatmul.mubr.f32.gmra.mrb[0].mxu0 %v1070
      %v1201 = vpop.f32.mrb[0].mxu0
      %v1202 = vadd.f32 0.0, %v1201
      %v1203 = vpop.f32.mrb[0].mxu0
      %1204 = vmatprep.mubr.f32.mxu0 0.0
      %1205 = vmatmul.mubr.f32.gmra.mrb[0].mxu0 %v1073
      %v1206 = vpop.f32.mrb[0].mxu0
      %v1207 = vadd.f32 0.0, %v1206
      %v1208 = vpop.f32.mrb[0].mxu0
      %1209 = vmatprep.mubr.f32.mxu0 0.0
      %1210 = vmatmul.mubr.f32.gmra.mrb[0].mxu0 %v1076
      %v1211 = vpop.f32.mrb[0].mxu0
      %v1212 = vadd.f32 0.0, %v1211
      %v1213 = vpop.f32.mrb[0].mxu0
      %1214 = vmatprep.mubr.f32.mxu0 0.0
      %1215 = vmatmul.mubr.f32.gmra.mrb[0].mxu0 %v1079
      %v1216 = vpop.f32.mrb[0].mxu0
      %v1217 = vadd.f32 0.0, %v1216
      %v1218 = vpop.f32.mrb[0].mxu0
      %1219 = vmatprep.mubr.f32.mxu0 0.0
      %1220 = vmatmul.mubr.f32.gmra.mrb[0].mxu0 %v1082
      %v1221 = vpop.f32.mrb[0].mxu0
      %v1222 = vadd.f32 0.0, %v1221
      %v1223 = vpop.f32.mrb[0].mxu0
      %1224 = vmatprep.mubr.f32.mxu0 0.0
      %1225 = vmatmul.mubr.f32.gmra.mrb[0].mxu0 %v1085
      %v1226 = vpop.f32.mrb[0].mxu0
      %v1227 = vadd.f32 0.0, %v1226
      %v1228 = vpop.f32.mrb[0].mxu0
      %1229 = vmatprep.mubr.f32.mxu0 0.0
      %1230 = vmatmul.mubr.f32.gmra.mrb[0].mxu0 %v1088
      %v1231 = vpop.f32.mrb[0].mxu0
      %v1232 = vadd.f32 0.0, %v1231
      %v1233 = vpop.f32.mrb[0].mxu0
      %1234 = vmatprep.mubr.f32.mxu0 0.0
      %1235 = vmatmul.mubr.f32.gmra.mrb[0].mxu0 %v1091
      %v1236 = vpop.f32.mrb[0].mxu0
      %v1237 = vadd.f32 0.0, %v1236
      %v1238 = vpop.f32.mrb[0].mxu0
      %1239 = vmatprep.mubr.f32.mxu0 0.0
      %1240 = vmatmul.mubr.f32.gmra.mrb[0].mxu0 %v1094
      %v1241 = vpop.f32.mrb[0].mxu0
      %v1242 = vadd.f32 0.0, %v1241
      %v1243 = vpop.f32.mrb[0].mxu0
      %1244 = vdwg.mxu0
      %v1245 = vsub.f32 %v997, %v1167
      %v1246 = vsub.f32 %v998, %v1172
      %v1247 = vsub.f32 %v999, %v1177
      %v1248 = vsub.f32 %v1000, %v1182
      %v1249 = vsub.f32 %v1001, %v1187
      %v1250 = vsub.f32 %v1002, %v1192
      %v1251 = vsub.f32 %v1003, %v1197
      %v1252 = vsub.f32 %v1004, %v1202
      %v1253 = vsub.f32 %v1005, %v1207
      %v1254 = vsub.f32 %v1006, %v1212
      %v1255 = vsub.f32 %v1007, %v1217
      %v1256 = vsub.f32 %v1008, %v1222
      %v1257 = vsub.f32 %v1009, %v1227
      %v1258 = vsub.f32 %v1010, %v1232
      %v1259 = vsub.f32 %v1011, %v1237
      %v1260 = vsub.f32 %v1012, %v1242
      %v1261 = vld [vmem:[#allocation9] sm:$0x1]
      %v1262 = vld [vmem:[#allocation12] sm:$0x1]
      %1263 = vxpose.xlu0.b32.start [1/16] %v1261, 128
      %1264 = vxpose.xlu0.b32.cont [2/16] 0.0, 128
      %1265 = vxpose.xlu0.b32.cont [3/16] 0.0, 128
      %1266 = vxpose.xlu0.b32.cont [4/16] 0.0, 128
      %1267 = vxpose.xlu0.b32.cont [5/16] 0.0, 128
      %1268 = vxpose.xlu0.b32.cont [6/16] 0.0, 128
      %1269 = vxpose.xlu0.b32.cont [7/16] 0.0, 128
      %1270 = vxpose.xlu0.b32.cont [8/16] 0.0, 128
      %1271 = vxpose.xlu0.b32.cont [9/16] 0.0, 128
      %1272 = vxpose.xlu0.b32.cont [10/16] 0.0, 128
      %1273 = vxpose.xlu0.b32.cont [11/16] 0.0, 128
      %1274 = vxpose.xlu0.b32.cont [12/16] 0.0, 128
      %1275 = vxpose.xlu0.b32.cont [13/16] 0.0, 128
      %1276 = vxpose.xlu0.b32.cont [14/16] 0.0, 128
      %1277 = vxpose.xlu0.b32.cont [15/16] 0.0, 128
      %1278 = vxpose.xlu0.b32.end [16/16] 0.0, 128
      %v1279 = vpop.trf.xlu0
      %v1280 = vpop.trf.xlu0
      %v1281 = vpop.trf.xlu0
      %v1282 = vpop.trf.xlu0
      %v1283 = vpop.trf.xlu0
      %v1284 = vpop.trf.xlu0
      %v1285 = vpop.trf.xlu0
      %v1286 = vpop.trf.xlu0
      %v1287 = vpop.trf.xlu0
      %v1288 = vpop.trf.xlu0
      %v1289 = vpop.trf.xlu0
      %v1290 = vpop.trf.xlu0
      %v1291 = vpop.trf.xlu0
      %v1292 = vpop.trf.xlu0
      %v1293 = vpop.trf.xlu0
      %v1294 = vpop.trf.xlu0
      %v1296 = vsel %vm1047, %v1279, 0
      %v1299 = vsel %vm1047, %v1280, 0
      %v1302 = vsel %vm1047, %v1281, 0
      %v1305 = vsel %vm1047, %v1282, 0
      %v1308 = vsel %vm1047, %v1283, 0
      %v1311 = vsel %vm1047, %v1284, 0
      %v1314 = vsel %vm1047, %v1285, 0
      %v1317 = vsel %vm1047, %v1286, 0
      %v1320 = vsel %vm1047, %v1287, 0
      %v1323 = vsel %vm1047, %v1288, 0
      %v1326 = vsel %vm1047, %v1289, 0
      %v1329 = vsel %vm1047, %v1290, 0
      %v1332 = vsel %vm1047, %v1291, 0
      %v1335 = vsel %vm1047, %v1292, 0
      %v1338 = vsel %vm1047, %v1293, 0
      %v1341 = vsel %vm1047, %v1294, 0
      %v1344 = vsel %vm1096, %v1262, 0
      %1346 = vmatprep.subr.mxu0 0.0
      %1347 = vmatpush1.msra.mxu0 %v1344
      %1348 = vmatprep.subr.mxu0 0.0
      %1349 = vmatpush1.msra.mxu0 0.0
      %1350 = vmatprep.subr.mxu0 0.0
      %1351 = vmatpush1.msra.mxu0 0.0
      %1352 = vmatprep.subr.mxu0 0.0
      %1353 = vmatpush1.msra.mxu0 0.0
      %1354 = vmatprep.subr.mxu0 0.0
      %1355 = vmatpush1.msra.mxu0 0.0
      %1356 = vmatprep.subr.mxu0 0.0
      %1357 = vmatpush1.msra.mxu0 0.0
      %1358 = vmatprep.subr.mxu0 0.0
      %1359 = vmatpush1.msra.mxu0 0.0
      %1360 = vmatprep.subr.mxu0 0.0
      %1361 = vmatpush1.msra.mxu0 0.0
      %1362 = vmatprep.subr.mxu0 0.0
      %1363 = vmatpush1.msra.mxu0 0.0
      %1364 = vmatprep.subr.mxu0 0.0
      %1365 = vmatpush1.msra.mxu0 0.0
      %1366 = vmatprep.subr.mxu0 0.0
      %1367 = vmatpush1.msra.mxu0 0.0
      %1368 = vmatprep.subr.mxu0 0.0
      %1369 = vmatpush1.msra.mxu0 0.0
      %1370 = vmatprep.subr.mxu0 0.0
      %1371 = vmatpush1.msra.mxu0 0.0
      %1372 = vmatprep.subr.mxu0 0.0
      %1373 = vmatpush1.msra.mxu0 0.0
      %1374 = vmatprep.subr.mxu0 0.0
      %1375 = vmatpush1.msra.mxu0 0.0
      %1376 = vmatprep.subr.mxu0 0.0
      %1377 = vmatpush1.msra.mxu0 0.0
      %1378 = vmatprep.subr.mxu0 0.0
      %1379 = vmatpush1.msra.mxu0 0.0
      %1380 = vmatprep.subr.mxu0 0.0
      %1381 = vmatpush1.msra.mxu0 0.0
      %1382 = vmatprep.subr.mxu0 0.0
      %1383 = vmatpush1.msra.mxu0 0.0
      %1384 = vmatprep.subr.mxu0 0.0
      %1385 = vmatpush1.msra.mxu0 0.0
      %1386 = vmatprep.subr.mxu0 0.0
      %1387 = vmatpush1.msra.mxu0 0.0
      %1388 = vmatprep.subr.mxu0 0.0
      %1389 = vmatpush1.msra.mxu0 0.0
      %1390 = vmatprep.subr.mxu0 0.0
      %1391 = vmatpush1.msra.mxu0 0.0
      %1392 = vmatprep.subr.mxu0 0.0
      %1393 = vmatpush1.msra.mxu0 0.0
      %1394 = vmatprep.subr.mxu0 0.0
      %1395 = vmatpush1.msra.mxu0 0.0
      %1396 = vmatprep.subr.mxu0 0.0
      %1397 = vmatpush1.msra.mxu0 0.0
      %1398 = vmatprep.subr.mxu0 0.0
      %1399 = vmatpush1.msra.mxu0 0.0
      %1400 = vmatprep.subr.mxu0 0.0
      %1401 = vmatpush1.msra.mxu0 0.0
      %1402 = vmatprep.subr.mxu0 0.0
      %1403 = vmatpush1.msra.mxu0 0.0
      %1404 = vmatprep.subr.mxu0 0.0
      %1405 = vmatpush1.msra.mxu0 0.0
      %1406 = vmatprep.subr.mxu0 0.0
      %1407 = vmatpush1.msra.mxu0 0.0
      %1408 = vmatprep.subr.mxu0 0.0
      %1409 = vmatpush1.msra.mxu0 0.0
      %1410 = vmatprep.mubr.f32.mxu0 0.0
      %1411 = vmatmul.mubr.f32.gmra.mrb[0].mxu0 %v1296
      %v1412 = vpop.f32.mrb[0].mxu0
      %v1413 = vadd.f32 0.0, %v1412
      %v1414 = vpop.f32.mrb[0].mxu0
      %1415 = vmatprep.mubr.f32.mxu0 0.0
      %1416 = vmatmul.mubr.f32.gmra.mrb[0].mxu0 %v1299
      %v1417 = vpop.f32.mrb[0].mxu0
      %v1418 = vadd.f32 0.0, %v1417
      %v1419 = vpop.f32.mrb[0].mxu0
      %1420 = vmatprep.mubr.f32.mxu0 0.0
      %1421 = vmatmul.mubr.f32.gmra.mrb[0].mxu0 %v1302
      %v1422 = vpop.f32.mrb[0].mxu0
      %v1423 = vadd.f32 0.0, %v1422
      %v1424 = vpop.f32.mrb[0].mxu0
      %1425 = vmatprep.mubr.f32.mxu0 0.0
      %1426 = vmatmul.mubr.f32.gmra.mrb[0].mxu0 %v1305
      %v1427 = vpop.f32.mrb[0].mxu0
      %v1428 = vadd.f32 0.0, %v1427
      %v1429 = vpop.f32.mrb[0].mxu0
      %1430 = vmatprep.mubr.f32.mxu0 0.0
      %1431 = vmatmul.mubr.f32.gmra.mrb[0].mxu0 %v1308
      %v1432 = vpop.f32.mrb[0].mxu0
      %v1433 = vadd.f32 0.0, %v1432
      %v1434 = vpop.f32.mrb[0].mxu0
      %1435 = vmatprep.mubr.f32.mxu0 0.0
      %1436 = vmatmul.mubr.f32.gmra.mrb[0].mxu0 %v1311
      %v1437 = vpop.f32.mrb[0].mxu0
      %v1438 = vadd.f32 0.0, %v1437
      %v1439 = vpop.f32.mrb[0].mxu0
      %1440 = vmatprep.mubr.f32.mxu0 0.0
      %1441 = vmatmul.mubr.f32.gmra.mrb[0].mxu0 %v1314
      %v1442 = vpop.f32.mrb[0].mxu0
      %v1443 = vadd.f32 0.0, %v1442
      %v1444 = vpop.f32.mrb[0].mxu0
      %1445 = vmatprep.mubr.f32.mxu0 0.0
      %1446 = vmatmul.mubr.f32.gmra.mrb[0].mxu0 %v1317
      %v1447 = vpop.f32.mrb[0].mxu0
      %v1448 = vadd.f32 0.0, %v1447
      %v1449 = vpop.f32.mrb[0].mxu0
      %1450 = vmatprep.mubr.f32.mxu0 0.0
      %1451 = vmatmul.mubr.f32.gmra.mrb[0].mxu0 %v1320
      %v1452 = vpop.f32.mrb[0].mxu0
      %v1453 = vadd.f32 0.0, %v1452
      %v1454 = vpop.f32.mrb[0].mxu0
      %1455 = vmatprep.mubr.f32.mxu0 0.0
      %1456 = vmatmul.mubr.f32.gmra.mrb[0].mxu0 %v1323
      %v1457 = vpop.f32.mrb[0].mxu0
      %v1458 = vadd.f32 0.0, %v1457
      %v1459 = vpop.f32.mrb[0].mxu0
      %1460 = vmatprep.mubr.f32.mxu0 0.0
      %1461 = vmatmul.mubr.f32.gmra.mrb[0].mxu0 %v1326
      %v1462 = vpop.f32.mrb[0].mxu0
      %v1463 = vadd.f32 0.0, %v1462
      %v1464 = vpop.f32.mrb[0].mxu0
      %1465 = vmatprep.mubr.f32.mxu0 0.0
      %1466 = vmatmul.mubr.f32.gmra.mrb[0].mxu0 %v1329
      %v1467 = vpop.f32.mrb[0].mxu0
      %v1468 = vadd.f32 0.0, %v1467
      %v1469 = vpop.f32.mrb[0].mxu0
      %1470 = vmatprep.mubr.f32.mxu0 0.0
      %1471 = vmatmul.mubr.f32.gmra.mrb[0].mxu0 %v1332
      %v1472 = vpop.f32.mrb[0].mxu0
      %v1473 = vadd.f32 0.0, %v1472
      %v1474 = vpop.f32.mrb[0].mxu0
      %1475 = vmatprep.mubr.f32.mxu0 0.0
      %1476 = vmatmul.mubr.f32.gmra.mrb[0].mxu0 %v1335
      %v1477 = vpop.f32.mrb[0].mxu0
      %v1478 = vadd.f32 0.0, %v1477
      %v1479 = vpop.f32.mrb[0].mxu0
      %1480 = vmatprep.mubr.f32.mxu0 0.0
      %1481 = vmatmul.mubr.f32.gmra.mrb[0].mxu0 %v1338
      %v1482 = vpop.f32.mrb[0].mxu0
      %v1483 = vadd.f32 0.0, %v1482
      %v1484 = vpop.f32.mrb[0].mxu0
      %1485 = vmatprep.mubr.f32.mxu0 0.0
      %1486 = vmatmul.mubr.f32.gmra.mrb[0].mxu0 %v1341
      %v1487 = vpop.f32.mrb[0].mxu0
      %v1488 = vadd.f32 0.0, %v1487
      %v1489 = vpop.f32.mrb[0].mxu0
      %1490 = vdwg.mxu0
      %v1491 = vmul.f32 %v1245, %v1413
      %v1492 = vmul.f32 %v1246, %v1418
      %v1493 = vmul.f32 %v1247, %v1423
      %v1494 = vmul.f32 %v1248, %v1428
      %v1495 = vmul.f32 %v1249, %v1433
      %v1496 = vmul.f32 %v1250, %v1438
      %v1497 = vmul.f32 %v1251, %v1443
      %v1498 = vmul.f32 %v1252, %v1448
      %v1499 = vmul.f32 %v1253, %v1453
      %v1500 = vmul.f32 %v1254, %v1458
      %v1501 = vmul.f32 %v1255, %v1463
      %v1502 = vmul.f32 %v1256, %v1468
      %v1503 = vmul.f32 %v1257, %v1473
      %v1504 = vmul.f32 %v1258, %v1478
      %v1505 = vmul.f32 %v1259, %v1483
      %v1506 = vmul.f32 %v1260, %v1488
      %v1507 = vmul.f32 %v1491, %v1491
      %v1508 = vmul.f32 %v1492, %v1492
      %v1509 = vmul.f32 %v1493, %v1493
      %v1510 = vmul.f32 %v1494, %v1494
      %v1511 = vmul.f32 %v1495, %v1495
      %v1512 = vmul.f32 %v1496, %v1496
      %v1513 = vmul.f32 %v1497, %v1497
      %v1514 = vmul.f32 %v1498, %v1498
      %v1515 = vmul.f32 %v1499, %v1499
      %v1516 = vmul.f32 %v1500, %v1500
      %v1517 = vmul.f32 %v1501, %v1501
      %v1518 = vmul.f32 %v1502, %v1502
      %v1519 = vmul.f32 %v1503, %v1503
      %v1520 = vmul.f32 %v1504, %v1504
      %v1521 = vmul.f32 %v1505, %v1505
      %v1522 = vmul.f32 %v1506, %v1506
      %v1523 = vlaneseq
      %v1524 = vshrl.u32 %v1523, 7
      %v1525 = vadd.s32 %v1524, 8
      %v1526 = vadd.s32 %v1524, 16
      %v1527 = vadd.s32 %v1524, 24
      %v1528 = vadd.s32 %v1524, 32
      %v1529 = vadd.s32 %v1524, 40
      %v1530 = vadd.s32 %v1524, 48
      %v1531 = vadd.s32 %v1524, 56
      %v1532 = vadd.s32 %v1524, 64
      %v1533 = vadd.s32 %v1524, 72
      %v1534 = vadd.s32 %v1524, 80
      %v1535 = vadd.s32 %v1524, 88
      %v1536 = vadd.s32 %v1524, 96
      %v1537 = vadd.s32 %v1524, 104
      %v1538 = vadd.s32 %v1524, 112
      %v1539 = vadd.s32 %v1524, 120
      %v1540 = vlaneseq
      %v1541 = vand.u32 %v1540, 127
      %v1542 = vsub.f32 %v1491, 1.0
      %v1543 = vsub.f32 %v1492, 1.0
      %v1544 = vsub.f32 %v1493, 1.0
      %v1545 = vsub.f32 %v1494, 1.0
      %v1546 = vsub.f32 %v1495, 1.0
      %v1547 = vsub.f32 %v1496, 1.0
      %v1548 = vsub.f32 %v1497, 1.0
      %v1549 = vsub.f32 %v1498, 1.0
      %v1550 = vsub.f32 %v1499, 1.0
      %v1551 = vsub.f32 %v1500, 1.0
      %v1552 = vsub.f32 %v1501, 1.0
      %v1553 = vsub.f32 %v1502, 1.0
      %v1554 = vsub.f32 %v1503, 1.0
      %v1555 = vsub.f32 %v1504, 1.0
      %v1556 = vsub.f32 %v1505, 1.0
      %v1557 = vsub.f32 %v1506, 1.0
      %vm1558 = vcmp.eq.s32.totalorder %v1524, %v1541
      %vm1559 = vcmp.eq.s32.totalorder %v1525, %v1541
      %vm1560 = vcmp.eq.s32.totalorder %v1526, %v1541
      %vm1561 = vcmp.eq.s32.totalorder %v1527, %v1541
      %vm1562 = vcmp.eq.s32.totalorder %v1528, %v1541
      %vm1563 = vcmp.eq.s32.totalorder %v1529, %v1541
      %vm1564 = vcmp.eq.s32.totalorder %v1530, %v1541
      %vm1565 = vcmp.eq.s32.totalorder %v1531, %v1541
      %vm1566 = vcmp.eq.s32.totalorder %v1532, %v1541
      %vm1567 = vcmp.eq.s32.totalorder %v1533, %v1541
      %vm1568 = vcmp.eq.s32.totalorder %v1534, %v1541
      %vm1569 = vcmp.eq.s32.totalorder %v1535, %v1541
      %vm1570 = vcmp.eq.s32.totalorder %v1536, %v1541
      %vm1571 = vcmp.eq.s32.totalorder %v1537, %v1541
      %vm1572 = vcmp.eq.s32.totalorder %v1538, %v1541
      %vm1573 = vcmp.eq.s32.totalorder %v1539, %v1541
      %v1574 = vmul.f32 %v1542, %v1542
      %v1575 = vmul.f32 %v1543, %v1543
      %v1576 = vmul.f32 %v1544, %v1544
      %v1577 = vmul.f32 %v1545, %v1545
      %v1578 = vmul.f32 %v1546, %v1546
      %v1579 = vmul.f32 %v1547, %v1547
      %v1580 = vmul.f32 %v1548, %v1548
      %v1581 = vmul.f32 %v1549, %v1549
      %v1582 = vmul.f32 %v1550, %v1550
      %v1583 = vmul.f32 %v1551, %v1551
      %v1584 = vmul.f32 %v1552, %v1552
      %v1585 = vmul.f32 %v1553, %v1553
      %v1586 = vmul.f32 %v1554, %v1554
      %v1587 = vmul.f32 %v1555, %v1555
      %v1588 = vmul.f32 %v1556, %v1556
      %v1589 = vmul.f32 %v1557, %v1557
      %v1590 = vmul.f32 %v1507, 0.005
      %v1591 = vmul.f32 %v1508, 0.005
      %v1592 = vmul.f32 %v1509, 0.005
      %v1593 = vmul.f32 %v1510, 0.005
      %v1594 = vmul.f32 %v1511, 0.005
      %v1595 = vmul.f32 %v1512, 0.005
      %v1596 = vmul.f32 %v1513, 0.005
      %v1597 = vmul.f32 %v1514, 0.005
      %v1598 = vmul.f32 %v1515, 0.005
      %v1599 = vmul.f32 %v1516, 0.005
      %v1600 = vmul.f32 %v1517, 0.005
      %v1601 = vmul.f32 %v1518, 0.005
      %v1602 = vmul.f32 %v1519, 0.005
      %v1603 = vmul.f32 %v1520, 0.005
      %v1604 = vmul.f32 %v1521, 0.005
      %v1605 = vmul.f32 %v1522, 0.005
      %v1606 = vsub.f32 %v1574, %v1590
      %v1607 = vsub.f32 %v1575, %v1591
      %v1608 = vsub.f32 %v1576, %v1592
      %v1609 = vsub.f32 %v1577, %v1593
      %v1610 = vsub.f32 %v1578, %v1594
      %v1611 = vsub.f32 %v1579, %v1595
      %v1612 = vsub.f32 %v1580, %v1596
      %v1613 = vsub.f32 %v1581, %v1597
      %v1614 = vsub.f32 %v1582, %v1598
      %v1615 = vsub.f32 %v1583, %v1599
      %v1616 = vsub.f32 %v1584, %v1600
      %v1617 = vsub.f32 %v1585, %v1601
      %v1618 = vsub.f32 %v1586, %v1602
      %v1619 = vsub.f32 %v1587, %v1603
      %v1620 = vsub.f32 %v1588, %v1604
      %v1621 = vsub.f32 %v1589, %v1605
      %v1622 = vsel %vm1558, %v1606, 0.0
      %v1623 = vsel %vm1559, %v1607, 0.0
      %v1624 = vsel %vm1560, %v1608, 0.0
      %v1625 = vsel %vm1561, %v1609, 0.0
      %v1626 = vsel %vm1562, %v1610, 0.0
      %v1627 = vsel %vm1563, %v1611, 0.0
      %v1628 = vsel %vm1564, %v1612, 0.0
      %v1629 = vsel %vm1565, %v1613, 0.0
      %v1630 = vsel %vm1566, %v1614, 0.0
      %v1631 = vsel %vm1567, %v1615, 0.0
      %v1632 = vsel %vm1568, %v1616, 0.0
      %v1633 = vsel %vm1569, %v1617, 0.0
      %v1634 = vsel %vm1570, %v1618, 0.0
      %v1635 = vsel %vm1571, %v1619, 0.0
      %v1636 = vsel %vm1572, %v1620, 0.0
      %v1637 = vsel %vm1573, %v1621, 0.0
      %v1638 = vadd.f32 %v1507, %v1508
      %v1639 = vadd.f32 %v1638, %v1509
      %v1640 = vadd.f32 %v1639, %v1510
      %v1641 = vadd.f32 %v1640, %v1511
      %v1642 = vadd.f32 %v1641, %v1512
      %v1643 = vadd.f32 %v1642, %v1513
      %v1644 = vadd.f32 %v1643, %v1514
      %v1645 = vadd.f32 %v1644, %v1515
      %v1646 = vadd.f32 %v1645, %v1516
      %v1647 = vadd.f32 %v1646, %v1517
      %v1648 = vadd.f32 %v1647, %v1518
      %v1649 = vadd.f32 %v1648, %v1519
      %v1650 = vadd.f32 %v1649, %v1520
      %v1651 = vadd.f32 %v1650, %v1521
      %v1652 = vadd.f32 %v1651, %v1522
      %1653 = vadd.xlane.f32.xlu0 %v1652
      %v1654 = vpop.xlane.xlu0 %1653
      %v1655 = vrot.slane %v1654, 4
      %v1656 = vadd.f32 %v1654, %v1655
      %v1657 = vrot.slane %v1656, 2
      %v1658 = vadd.f32 %v1656, %v1657
      %v1659 = vrot.slane %v1658, 1
      %v1660 = vadd.f32 %v1658, %v1659
      %s1661 = vtos %v1660
      %s1662 = smul.f32 %s1661, 0.005
      %v1663 = vadd.f32 %v1622, %v1623
      %v1664 = vadd.f32 %v1663, %v1624
      %v1665 = vadd.f32 %v1664, %v1625
      %v1666 = vadd.f32 %v1665, %v1626
      %v1667 = vadd.f32 %v1666, %v1627
      %v1668 = vadd.f32 %v1667, %v1628
      %v1669 = vadd.f32 %v1668, %v1629
      %v1670 = vadd.f32 %v1669, %v1630
      %v1671 = vadd.f32 %v1670, %v1631
      %v1672 = vadd.f32 %v1671, %v1632
      %v1673 = vadd.f32 %v1672, %v1633
      %v1674 = vadd.f32 %v1673, %v1634
      %v1675 = vadd.f32 %v1674, %v1635
      %v1676 = vadd.f32 %v1675, %v1636
      %v1677 = vadd.f32 %v1676, %v1637
      %1678 = vadd.xlane.f32.xlu0 %v1677
      %v1679 = vpop.xlane.xlu0 %1678
      %v1680 = vrot.slane %v1679, 4
      %v1681 = vadd.f32 %v1679, %v1680
      %v1682 = vrot.slane %v1681, 2
      %v1683 = vadd.f32 %v1681, %v1682
      %v1684 = vrot.slane %v1683, 1
      %v1685 = vadd.f32 %v1683, %v1684
      %s1686 = vtos %v1685
      %s1687 = sadd.f32 %s1662, %s1686
      %vm1688 = vcmp.eq.s32.totalorder %v1524, 0
      %vm1689 = vcmp.eq.s32.totalorder %v1541, 0
      %vm1690 = vmand %vm1688, %vm1689
      %v1691 = vstv %s1687
      %v1692 = vsel %vm1690, %v1691, 0.0
      %1693 = vst [vmem:[#allocation14] sm:$0xff] %v1692
    $region65: #{tpu_custom_call.1} parent=1 // pred_fallthru
      _
    // Predicated region
    $region66: #{tpu_custom_call.1} parent=1 // pred_check
      _
    $region67: #{tpu_custom_call.1} parent=1 // pred_check_branch
      %1695 = sbr.rel (0) target = $region69
    $region68: #{tpu_custom_call.1} parent=1 // pred_region
      %s1697 = ssub.s32 128, 128
      %1698 = vsyncadd [#allocation5], %s1697
      %s1700 = sshll.u32 [#allocation14], 4
      %s1701 = int_to_ptr.vmem [resolvable:$true] %s1700
      %1703 = dma.vmem_to_hbm [thread:$0]  %s1701, 128, %s6, [#allocation5]
    $region69: #{tpu_custom_call.1} parent=1 // pred_fallthru
      _
    // Predicated region
    $region70: #{tpu_custom_call.1} parent=1 // pred_check
      _
    $region71: #{tpu_custom_call.1} parent=1 // pred_check_branch
      %1705 = sbr.rel (0) target = $region73
    $region72: #{tpu_custom_call.1} parent=1 // pred_region
      %1706 = dma.done [#allocation5], 128
    $region73: #{tpu_custom_call.1} parent=1 // pred_fallthru
      _
    %1707 = vsyncpa [#allocation4], 1
    %1708 = vsyncpa [#allocation7], 1
    %1709 = vsyncpa [#allocation10], 1
    %1710 = vsyncpa [#allocation13], 1
    %1711 = vsyncpa [#allocation5], 1

</llo_original>
